<compile_context>
chip_gen: v6e
topology: v6e:2x2x1
jax: 0.10.0
libtpu: 0.0.40
codegen_flags: <defaults>
</compile_context>

<pallas_src>
import functools
import math

import jax
import jax.numpy as jnp
from jax.experimental import pallas as pl
from jax.experimental.pallas import tpu as pltpu


def _neighbour_offsets(kernel_size, W):
  """Flattened-pixel offsets (di*W + dj) for the k*k neighbourhood, in the same
  order as the reference expand_shift (row offset outer, column offset inner)."""
  ms = (kernel_size - 1) // 2
  offs = []
  for di in range(-ms, ms + 1):
    for dj in range(-ms, ms + 1):
      offs.append(di * W + dj)
  return offs


def _attention_conv_kernel(
    x_ref,       # (C, L)                 L = TB*H*W packed pixels (lanes)
    wqkv_ref,    # (2*AH + OH, C)         fused [Wq*scale; Wk; Wv]^T, gamma folded
    bqkv_ref,    # (2*AH + OH, 1)         beta folded
    scorew_ref,  # (heads*k2, (k2+1)*AH)  [head-selector block-diag | pos_k]
    mask_ref,    # (k2, L)                1.0 where the shifted neighbour is valid
    selw_ref,    # (k2*OH, heads*k2)      expands softmax weights to OH channels
    wf_ref,      # (Cout, OH)             final linear, transposed
    bf_ref,      # (Cout, 1)
    out_ref,     # (Cout, L)
    rhs_ref,     # VMEM scratch ((k2+1)*AH, L) f32
    *, kernel_size, num_heads, attn_size, out_single, W,
    ln_eps, attn_eps, approx_recip):
  L = x_ref.shape[1]
  k2 = kernel_size * kernel_size
  AH = attn_size * num_heads
  OH = out_single * num_heads

  x = x_ref[...].astype(jnp.float32)                        # (C, L)

  # ---- LayerNorm stats over channels; gamma/beta already folded into Wqkv ----
  mean = jnp.mean(x, axis=0, keepdims=True)                 # (1, L)
  var = jnp.mean(jnp.square(x - mean), axis=0, keepdims=True)
  z = (x - mean) * jax.lax.rsqrt(var + ln_eps)              # (C, L)

  # ---- fused Q|K|V projection: ONE MXU matmul, lane-dense N = L ----
  qkv = jnp.dot(wqkv_ref[...], z,
                preferred_element_type=jnp.float32) + bqkv_ref[...]
  q = qkv[:AH, :]                      # attention scale already folded into Wq
  k = qkv[AH:2 * AH, :]
  v = qkv[2 * AH:, :]

  # ---- zero-padded neighbourhood gather: masked lane-rolls over the packed
  # lane axis (shift mod L).  The mask zeroes out-of-bounds neighbours, which
  # also kills any wrap across image / batch-tile boundaries. ----
  offs = _neighbour_offsets(kernel_size, W)
  shifts = [(-o) % L for o in offs]

  # Write q*k_shift parts (and q for the pos term) straight into VMEM scratch.
  for p in range(k2):
    kr = pltpu.roll(k, shifts[p], axis=1) if shifts[p] else k     # XLU
    qk = q * kr
    if offs[p]:                                                   # centre needs no mask
      qk = qk * mask_ref[p:p + 1, :]
    rhs_ref[p * AH:(p + 1) * AH, :] = qk
  rhs_ref[k2 * AH:, :] = q

  # ---- ALL (head, position) scores with ONE matmul ----
  scores = jnp.dot(scorew_ref[...], rhs_ref[...],
                   preferred_element_type=jnp.float32)      # (heads*k2, L)

  # ---- per-head softmax over the k2 positions, + eps, re-masked for V ----
  slabs = []
  for h in range(num_heads):
    slab = scores[h * k2:(h + 1) * k2, :]                   # (k2, L)
    m = jnp.max(slab, axis=0, keepdims=True)
    e = jnp.exp(slab - m)
    denom = jnp.sum(e, axis=0, keepdims=True)
    inv = pl.reciprocal(denom, approx=True) if approx_recip else 1.0 / denom
    # zero-padded V contributes nothing at out-of-bounds neighbours
    slabs.append((e * inv + attn_eps) * mask_ref[...])
  weights_all = jnp.concatenate(slabs, axis=0)              # (heads*k2, L)

  # ---- expand per-head weights to all OH channels: ONE selector matmul ----
  wexp = jnp.dot(selw_ref[...], weights_all,
                 preferred_element_type=jnp.float32)        # (k2*OH, L)

  # ---- weighted sum of shifted V, all heads at once ----
  acc = jnp.zeros((OH, L), jnp.float32)
  for p in range(k2):
    vr = pltpu.roll(v, shifts[p], axis=1) if shifts[p] else v
    acc = acc + wexp[p * OH:(p + 1) * OH, :] * vr

  # ---- heads concat -> final linear: ONE MXU matmul, lane-dense store ----
  out = jnp.dot(wf_ref[...], acc,
                preferred_element_type=jnp.float32) + bf_ref[...]
  out_ref[...] = out.astype(out_ref.dtype)


def positional_encoding(kernel_size, d_model):
  """Same as AttentionConv2D.create_positional_encoding (plain-JAX glue)."""
  seq = kernel_size ** 2
  pos = jnp.arange(seq, dtype=jnp.float32)[:, None]
  div = jnp.exp(jnp.arange(0, d_model, 2, dtype=jnp.float32)
                * (-math.log(10000.0) / d_model))
  width = d_model + d_model % 2
  pe = jnp.zeros((seq, width), jnp.float32)
  pe = pe.at[:, 0::2].set(jnp.sin(pos * div))
  pe = pe.at[:, 1::2].set(jnp.cos(pos * div))
  return pe[:, :d_model]


def _uniform(key, shape, bound):
  return jax.random.uniform(key, shape, jnp.float32, -bound, bound)


def init_params(key, input_size, output_size, kernel_size, num_heads):
  """Synthetic parameters matching the module's shapes.

  Linear weights are stored as (in, out), so y = x @ W + b — same semantics as
  torch's x @ W.T + b with W stored (out, in)."""
  del kernel_size
  attn_size = int(round(input_size / num_heads))
  out_single = int(round(output_size / num_heads))
  AH = attn_size * num_heads
  OH = out_single * num_heads
  ks = jax.random.split(key, 10)
  lim_in = 1.0 / math.sqrt(input_size)
  lim_oh = 1.0 / math.sqrt(OH)
  params = dict(
      wq=_uniform(ks[0], (input_size, AH), lim_in),
      bq=_uniform(ks[1], (AH,), lim_in),
      wk=_uniform(ks[2], (input_size, AH), lim_in),
      bk=_uniform(ks[3], (AH,), lim_in),
      wv=_uniform(ks[4], (input_size, OH), lim_in),
      bv=_uniform(ks[5], (OH,), lim_in),
      wpos=_uniform(ks[6], (input_size, AH), lim_in),
      bpos=_uniform(ks[7], (AH,), lim_in),
      wf=_uniform(ks[8], (OH, output_size), lim_oh),
      bf=_uniform(ks[9], (output_size,), lim_oh),
      gamma=jnp.ones((input_size,), jnp.float32),
      beta=jnp.zeros((input_size,), jnp.float32),
  )
  return params, attn_size, out_single


def attention_conv2d(x_nchw, params, attn_size, out_single, *,
                     kernel_size=3, stride=1, num_heads=2,
                     approx_reciprocal=True, io_dtype=jnp.float32):
  """Pallas forward.  io_dtype=jnp.bfloat16 halves activation HBM traffic for
  HBM-bound deployments (validate such variants with a bf16-level tolerance)."""
  B, C, H, W = x_nchw.shape
  AH = attn_size * num_heads
  OH = out_single * num_heads
  Cout = params['wf'].shape[1]
  ms = (kernel_size - 1) // 2
  k2 = kernel_size * kernel_size
  HW = H * W
  scale = float(attn_size) ** (-0.5)

  # ---------------- one-time parameter packing (plain-JAX glue) --------------
  with jax.default_matmul_precision("highest"):
    # Fold the attention scale into the Q rows and the LayerNorm affine into
    # the fused QKV weights:  W @ (z*gamma + beta) + b = (W*gamma) @ z + (W@beta + b)
    wqkv = jnp.concatenate([params['wq'] * scale, params['wk'], params['wv']],
                           axis=1).T                          # (2AH+OH, C)
    bqkv = jnp.concatenate([params['bq'] * scale, params['bk'], params['bv']])
    bqkv_f = (bqkv + wqkv @ params['beta'])[:, None]          # (2AH+OH, 1)
    wqkv_f = wqkv * params['gamma'][None, :]                  # (2AH+OH, C)
    wf_t = params['wf'].T                                     # (Cout, OH)
    bf_t = params['bf'][:, None]                              # (Cout, 1)

    # pos_k = to_pos(positional_encoding): (k2, AH)
    pe = positional_encoding(kernel_size, C)
    pos_k = pe @ params['wpos'] + params['bpos']

  # Score matrix so ONE in-kernel matmul yields, for row (head h, position p):
  #   sum_{a in head h} (q * k_shift_p)[a]  +  sum_{a in head h} q[a]*pos_k[p,a]
  sel = (jnp.arange(AH)[None, :] // attn_size
         == jnp.arange(num_heads)[:, None]).astype(jnp.float32)   # (heads, AH)
  eye_p = jnp.eye(k2, dtype=jnp.float32)
  bigsel = (eye_p[None, :, :, None] * sel[:, None, None, :]
            ).reshape(num_heads * k2, k2 * AH)
  posmat = (sel[:, None, :] * pos_k[None, :, :]
            ).reshape(num_heads * k2, AH)
  score_w = jnp.concatenate([bigsel, posmat], axis=1)        # (heads*k2, (k2+1)*AH)
  # TODO(synk): at realistic channel counts (C >= 64) split this ~89%-zero
  # block-diagonal score matmul per head to avoid redundant MACs / rhs VMEM.

  # Selector that expands the (heads*k2) per-head softmax weights to all OH
  # output channels in one MXU matmul: wexp[p*OH + c] = weights[c//out_single][p].
  rows_i = jnp.arange(k2 * OH)
  cols_i = (rows_i % OH) // out_single * k2 + rows_i // OH
  sel_oh = jnp.zeros((k2 * OH, num_heads * k2),
                     jnp.float32).at[rows_i, cols_i].set(1.0)

  # validity mask of every shifted neighbour position (flattened single image)
  rr = jnp.arange(H)[:, None]
  cc = jnp.arange(W)[None, :]
  mrows = []
  for p in range(k2):
    di = p // kernel_size - ms
    dj = p % kernel_size - ms
    m = ((rr + di >= 0) & (rr + di < H) & (cc + dj >= 0) & (cc + dj < W))
    mrows.append(m.reshape(HW))
  mask1 = jnp.stack(mrows).astype(jnp.float32)               # (k2, HW)

  # ---------------- batch tiling: pack TB images along the lane axis ---------
  param_bytes = 4 * int(wqkv_f.size + bqkv_f.size + score_w.size
                        + sel_oh.size + wf_t.size + bf_t.size)
  # rows (per lane, f32) that stay live inside one grid step, incl. the rhs
  # scratch, the (k2, L) mask block and headroom for temporaries.
  live_rows = (2 * C + 2 * (2 * AH + OH) + (k2 + 1) * AH
               + 3 * num_heads * k2 + 2 * k2 * OH + 3 * OH
               + 2 * Cout + 2 * k2 + 32)

  def _vmem_need(tb):
    L = tb * HW
    return (2 * (C + Cout) * L * 4      # double-buffered x / out blocks
            + 2 * param_bytes           # parameters (default double buffer)
            + 4 * L * live_rows)        # live intermediates + scratch + mask

  def _pick_tb():
    budget = 20 * 2 ** 20               # fits every generation with margin
    best = 1
    for tb in range(1, B + 1):
      if B % tb:
        continue
      if _vmem_need(tb) > budget:
        continue
      if B >= 2 and B // tb < 2:
        continue                        # keep >= 2 grid steps (both v7x cores)
      best = tb
    return best

  TB = _pick_tb()
  L = TB * HW
  need = _vmem_need(TB)
  # Request only what is actually resident (+50% and a fixed pad), capped so it
  # fits comfortably inside v7x's 64 MiB per TensorCore.
  vmem_limit = int(min(40 * 2 ** 20,
                       max(16 * 2 ** 20, (3 * need) // 2 + 2 * 2 ** 20)))

  mask_tiled = jnp.tile(mask1, (1, TB))                      # (k2, L)

  # Pack the batch along lanes: (B,C,H,W) -> (C, B*HW); the inverse on output.
  x_packed = jnp.transpose(x_nchw, (1, 0, 2, 3)).reshape(C, B * HW).astype(io_dtype)

  kernel = functools.partial(
      _attention_conv_kernel,
      kernel_size=kernel_size, num_heads=num_heads,
      attn_size=attn_size, out_single=out_single, W=W,
      ln_eps=1e-5, attn_eps=1e-8, approx_recip=approx_reciprocal)

  operands = (x_packed, wqkv_f, bqkv_f, score_w, mask_tiled, sel_oh, wf_t, bf_t)

  # Parameters keep the default double buffer (pl.Buffered(1) would shave a few
  # KiB here but is not worth the extra lowering surface at these sizes).
  def _full(a):
    return pl.BlockSpec(a.shape, lambda b: (0, 0))

  in_specs = ([pl.BlockSpec((C, L), lambda b: (0, b))] +
              [_full(a) for a in operands[1:]])

  out = pl.pallas_call(
      kernel,
      out_shape=jax.ShapeDtypeStruct((Cout, B * HW), io_dtype),
      grid_spec=pltpu.PrefetchScalarGridSpec(
          num_scalar_prefetch=0,
          grid=(B // TB,),               # TB images per step, >= 2 steps when B>=2
          in_specs=in_specs,
          out_specs=pl.BlockSpec((Cout, L), lambda b: (0, b)),
          scratch_shapes=[pltpu.VMEM(((k2 + 1) * AH, L), jnp.float32)]),
      compiler_params=pltpu.CompilerParams(
          dimension_semantics=("parallel",),
          vmem_limit_bytes=vmem_limit),
  )(*operands)

  out = (out.astype(jnp.float32)
         .reshape(Cout, B, H, W).transpose(1, 0, 2, 3))      # back to NCHW
  # TODO(synk): for stride > 1 the strided query positions could be computed
  # directly in-kernel (saves stride^2 of score/softmax/final-matmul work);
  # the demo uses stride=1 so the slice below is exact.
  return out[:, :, ::stride, ::stride]


def attention_conv2d_reference(x_nchw, params, attn_size, out_single, *,
                               kernel_size=3, stride=1, num_heads=2,
                               matmul_precision="highest"):
  """Direct pure-JAX transcription of the PyTorch module (validation only)."""
  B, C, H, W = x_nchw.shape
  ms = (kernel_size - 1) // 2
  scale = float(attn_size) ** (-0.5)

  with jax.default_matmul_precision(matmul_precision):
    x = jnp.transpose(x_nchw, (0, 2, 3, 1)).astype(jnp.float32)   # NHWC
    mean = jnp.mean(x, axis=-1, keepdims=True)
    var = jnp.mean(jnp.square(x - mean), axis=-1, keepdims=True)
    ln = (x - mean) / jnp.sqrt(var + 1e-5) * params['gamma'] + params['beta']

    q = ln @ params['wq'] + params['bq']
    k = ln @ params['wk'] + params['bk']
    v = ln @ params['wv'] + params['bv']

    pe = positional_encoding(kernel_size, C)
    pos_k = pe @ params['wpos'] + params['bpos']                  # (k2, AH)

    def expand_shift(t):                                          # zero padding
      tp = jnp.pad(t, ((0, 0), (ms, ms), (ms, ms), (0, 0)))
      outs = []
      for di in range(-ms, ms + 1):
        for dj in range(-ms, ms + 1):
          outs.append(tp[:, ms + di:ms + di + H, ms + dj:ms + dj + W, :])
      return jnp.stack(outs, axis=3)                              # (B,H,W,k2,ch)

    Ks = expand_shift(k) + pos_k[None, None, None, :, :]
    Vs = expand_shift(v)

    outs = []
    for h in range(num_heads):
      a0, a1 = h * attn_size, (h + 1) * attn_size
      o0, o1 = h * out_single, (h + 1) * out_single
      att = jnp.einsum('bhwa,bhwpa->bhwp', q[..., a0:a1], Ks[..., a0:a1]) * scale
      att = jax.nn.softmax(att, axis=-1) + 1e-8
      outs.append(jnp.einsum('bhwp,bhwpo->bhwo', att, Vs[..., o0:o1]))
    out = jnp.concatenate(outs, axis=-1) @ params['wf'] + params['bf']
    out = jnp.transpose(out, (0, 3, 1, 2))
    return out[:, :, ::stride, ::stride]


if __name__ == "__main__":
  B, C_in, H, W = 2, 8, 16, 16
  C_out = 8
  kernel_size, stride, num_heads = 3, 1, 2

  key = jax.random.PRNGKey(0)
  kx, kp = jax.random.split(key)
  x = jax.random.normal(kx, (B, C_in, H, W), jnp.float32)
  params, attn_size, out_single = init_params(kp, C_in, C_out, kernel_size,
                                              num_heads)

  # Reference at full f32 matmul precision, plus a bf16-matmul reference used
  # only to calibrate the tolerance to this machine's default MXU f32 behaviour
  # (so the f32 path gets a tight, non-hand-waved check).
  ref_hi = attention_conv2d_reference(x, params, attn_size, out_single,
                                      kernel_size=kernel_size, stride=stride,
                                      num_heads=num_heads,
                                      matmul_precision="highest")
  ref_lo = attention_conv2d_reference(x, params, attn_size, out_single,
                                      kernel_size=kernel_size, stride=stride,
                                      num_heads=num_heads,
                                      matmul_precision="bfloat16")
  spread = float(jnp.max(jnp.abs(ref_hi - ref_lo)))

  # Exact-reciprocal f32 path: precision-calibrated tight check.
  y_exact = attention_conv2d(x, params, attn_size, out_single,
                             kernel_size=kernel_size, stride=stride,
                             num_heads=num_heads, approx_reciprocal=False)
  y_exact = jax.block_until_ready(y_exact)
  assert y_exact.shape == (B, C_out, H, W), y_exact.shape
  err_exact = float(jnp.max(jnp.abs(y_exact - ref_hi)))
  tol_exact = 2e-4 + 3.0 * spread
  assert err_exact < tol_exact, f"exact path: err={err_exact} tol={tol_exact}"

  # Default fast path (approx EUP reciprocal in the softmax): small extra budget.
  y_fast = attention_conv2d(x, params, attn_size, out_single,
                            kernel_size=kernel_size, stride=stride,
                            num_heads=num_heads, approx_reciprocal=True)
  y_fast = jax.block_until_ready(y_fast)
  assert y_fast.shape == (B, C_out, H, W), y_fast.shape
  err_fast = float(jnp.max(jnp.abs(y_fast - ref_hi)))
  tol_fast = tol_exact + 5e-3
  assert err_fast < tol_fast, f"fast path: err={err_fast} tol={tol_fast}"

  print("KERNEL_OK")
</pallas_src>

<mosaic_0001>
module attributes {stable_mosaic.version = 11 : i64} {
  func.func @_attention_conv_kernel(%arg0: i32, %arg1: memref<8x256xf32, #tpu.memory_space<vmem>>, %arg2: memref<24x8xf32, #tpu.memory_space<vmem>>, %arg3: memref<24x1xf32, #tpu.memory_space<vmem>>, %arg4: memref<18x80xf32, #tpu.memory_space<vmem>>, %arg5: memref<9x256xf32, #tpu.memory_space<vmem>>, %arg6: memref<72x18xf32, #tpu.memory_space<vmem>>, %arg7: memref<8x8xf32, #tpu.memory_space<vmem>>, %arg8: memref<8x1xf32, #tpu.memory_space<vmem>>, %arg9: memref<8x256xf32, #tpu.memory_space<vmem>>, %arg10: memref<80x256xf32, #tpu.memory_space<vmem>>) attributes {dimension_semantics = [#tpu.dimension_semantics<parallel>], iteration_bounds = array<i64: 2>, scalar_prefetch = 0 : i64, scratch_operands = 1 : i64, tpu.core_type = #tpu.core_type<tc>, window_params = [{transform_indices = @transform_0, window_bounds = array<i64: 8, 256>}, {pipeline_mode = #tpu.pipeline_mode<synchronous>, transform_indices = @transform_1, window_bounds = array<i64: 24, 8>}, {pipeline_mode = #tpu.pipeline_mode<synchronous>, transform_indices = @transform_2, window_bounds = array<i64: 24, 1>}, {pipeline_mode = #tpu.pipeline_mode<synchronous>, transform_indices = @transform_3, window_bounds = array<i64: 18, 80>}, {pipeline_mode = #tpu.pipeline_mode<synchronous>, transform_indices = @transform_4, window_bounds = array<i64: 9, 256>}, {pipeline_mode = #tpu.pipeline_mode<synchronous>, transform_indices = @transform_5, window_bounds = array<i64: 72, 18>}, {pipeline_mode = #tpu.pipeline_mode<synchronous>, transform_indices = @transform_6, window_bounds = array<i64: 8, 8>}, {pipeline_mode = #tpu.pipeline_mode<synchronous>, transform_indices = @transform_7, window_bounds = array<i64: 8, 1>}, {transform_indices = @transform_8, window_bounds = array<i64: 8, 256>}]} {
    %c0 = arith.constant 0 : index
    %c0_0 = arith.constant 0 : index
    %0 = vector.load %arg1[%c0, %c0_0] : memref<8x256xf32, #tpu.memory_space<vmem>>, vector<8x256xf32>
    %cst = arith.constant dense<0.000000e+00> : vector<256xf32>
    %1 = vector.multi_reduction <add>, %0, %cst [0] : vector<8x256xf32> to vector<256xf32>
    %2 = vector.shape_cast %1 : vector<256xf32> to vector<1x256xf32>
    %cst_1 = arith.constant 8.000000e+00 : f32
    %3 = vector.broadcast %cst_1 : f32 to vector<1x256xf32>
    %4 = arith.divf %2, %3 : vector<1x256xf32>
    %5 = vector.broadcast %4 : vector<1x256xf32> to vector<8x256xf32>
    %6 = arith.subf %0, %5 : vector<8x256xf32>
    %7 = arith.mulf %6, %6 : vector<8x256xf32>
    %cst_2 = arith.constant dense<0.000000e+00> : vector<256xf32>
    %8 = vector.multi_reduction <add>, %7, %cst_2 [0] : vector<8x256xf32> to vector<256xf32>
    %9 = vector.shape_cast %8 : vector<256xf32> to vector<1x256xf32>
    %cst_3 = arith.constant 8.000000e+00 : f32
    %10 = vector.broadcast %cst_3 : f32 to vector<1x256xf32>
    %11 = arith.divf %9, %10 : vector<1x256xf32>
    %12 = vector.broadcast %4 : vector<1x256xf32> to vector<8x256xf32>
    %13 = arith.subf %0, %12 : vector<8x256xf32>
    %cst_4 = arith.constant 9.99999974E-6 : f32
    %14 = vector.broadcast %cst_4 : f32 to vector<1x256xf32>
    %15 = arith.addf %11, %14 : vector<1x256xf32>
    %16 = math.rsqrt %15 : vector<1x256xf32>
    %17 = vector.broadcast %16 : vector<1x256xf32> to vector<8x256xf32>
    %18 = arith.mulf %13, %17 : vector<8x256xf32>
    %c0_5 = arith.constant 0 : index
    %c0_6 = arith.constant 0 : index
    %19 = vector.load %arg2[%c0_5, %c0_6] : memref<24x8xf32, #tpu.memory_space<vmem>>, vector<24x8xf32>
    %cst_7 = arith.constant dense<0.000000e+00> : vector<24x256xf32>
    %20 = tpu.matmul %19, %18, %cst_7 {dimension_numbers = #tpu.dot_dimension_numbers<[1], [0], [0], [1], [0, 0, 1, 1], [], []>} : vector<24x8xf32>, vector<8x256xf32>, vector<24x256xf32> -> vector<24x256xf32>
    %c0_8 = arith.constant 0 : index
    %c0_9 = arith.constant 0 : index
    %21 = vector.load %arg3[%c0_8, %c0_9] : memref<24x1xf32, #tpu.memory_space<vmem>>, vector<24x1xf32>
    %22 = vector.broadcast %21 : vector<24x1xf32> to vector<24x256xf32>
    %23 = arith.addf %20, %22 : vector<24x256xf32>
    %24 = vector.extract_strided_slice %23 {offsets = [0, 0], sizes = [8, 256], strides = [1, 1]} : vector<24x256xf32> to vector<8x256xf32>
    %25 = vector.extract_strided_slice %23 {offsets = [8, 0], sizes = [8, 256], strides = [1, 1]} : vector<24x256xf32> to vector<8x256xf32>
    %26 = vector.extract_strided_slice %23 {offsets = [16, 0], sizes = [8, 256], strides = [1, 1]} : vector<24x256xf32> to vector<8x256xf32>
    %c17_i32 = arith.constant 17 : i32
    %27 = tpu.dynamic_rotate %25 by %c17_i32 dim 1 : vector<8x256xf32>, i32 -> vector<8x256xf32>
    %28 = arith.mulf %24, %27 : vector<8x256xf32>
    %c0_10 = arith.constant 0 : index
    %c0_11 = arith.constant 0 : index
    %29 = vector.load %arg5[%c0_10, %c0_11] : memref<9x256xf32, #tpu.memory_space<vmem>>, vector<1x256xf32>
    %30 = vector.broadcast %29 : vector<1x256xf32> to vector<8x256xf32>
    %31 = arith.mulf %28, %30 : vector<8x256xf32>
    %c0_12 = arith.constant 0 : index
    %c0_13 = arith.constant 0 : index
    %32 = vector.load %arg10[%c0_12, %c0_13] : memref<80x256xf32, #tpu.memory_space<vmem>>, vector<8x256xf32>
    tpu.vector_store %arg10[%c0_12, %c0_13], %31 {strides = array<i32>} : memref<80x256xf32, #tpu.memory_space<vmem>>, vector<8x256xf32>,
    %c16_i32 = arith.constant 16 : i32
    %33 = tpu.dynamic_rotate %25 by %c16_i32 dim 1 : vector<8x256xf32>, i32 -> vector<8x256xf32>
    %34 = arith.mulf %24, %33 : vector<8x256xf32>
    %c1 = arith.constant 1 : index
    %c0_14 = arith.constant 0 : index
    %35 = vector.load %arg5[%c1, %c0_14] : memref<9x256xf32, #tpu.memory_space<vmem>>, vector<1x256xf32>
    %36 = vector.broadcast %35 : vector<1x256xf32> to vector<8x256xf32>
    %37 = arith.mulf %34, %36 : vector<8x256xf32>
    %c8 = arith.constant 8 : index
    %c0_15 = arith.constant 0 : index
    %38 = vector.load %arg10[%c8, %c0_15] : memref<80x256xf32, #tpu.memory_space<vmem>>, vector<8x256xf32>
    tpu.vector_store %arg10[%c8, %c0_15], %37 {strides = array<i32>} : memref<80x256xf32, #tpu.memory_space<vmem>>, vector<8x256xf32>,
    %c15_i32 = arith.constant 15 : i32
    %39 = tpu.dynamic_rotate %25 by %c15_i32 dim 1 : vector<8x256xf32>, i32 -> vector<8x256xf32>
    %40 = arith.mulf %24, %39 : vector<8x256xf32>
    %c2 = arith.constant 2 : index
    %c0_16 = arith.constant 0 : index
    %41 = vector.load %arg5[%c2, %c0_16] : memref<9x256xf32, #tpu.memory_space<vmem>>, vector<1x256xf32>
    %42 = vector.broadcast %41 : vector<1x256xf32> to vector<8x256xf32>
    %43 = arith.mulf %40, %42 : vector<8x256xf32>
    %c16 = arith.constant 16 : index
    %c0_17 = arith.constant 0 : index
    %44 = vector.load %arg10[%c16, %c0_17] : memref<80x256xf32, #tpu.memory_space<vmem>>, vector<8x256xf32>
    tpu.vector_store %arg10[%c16, %c0_17], %43 {strides = array<i32>} : memref<80x256xf32, #tpu.memory_space<vmem>>, vector<8x256xf32>,
    %c1_i32 = arith.constant 1 : i32
    %45 = tpu.dynamic_rotate %25 by %c1_i32 dim 1 : vector<8x256xf32>, i32 -> vector<8x256xf32>
    %46 = arith.mulf %24, %45 : vector<8x256xf32>
    %c3 = arith.constant 3 : index
    %c0_18 = arith.constant 0 : index
    %47 = vector.load %arg5[%c3, %c0_18] : memref<9x256xf32, #tpu.memory_space<vmem>>, vector<1x256xf32>
    %48 = vector.broadcast %47 : vector<1x256xf32> to vector<8x256xf32>
    %49 = arith.mulf %46, %48 : vector<8x256xf32>
    %c24 = arith.constant 24 : index
    %c0_19 = arith.constant 0 : index
    %50 = vector.load %arg10[%c24, %c0_19] : memref<80x256xf32, #tpu.memory_space<vmem>>, vector<8x256xf32>
    tpu.vector_store %arg10[%c24, %c0_19], %49 {strides = array<i32>} : memref<80x256xf32, #tpu.memory_space<vmem>>, vector<8x256xf32>,
    %51 = arith.mulf %24, %25 : vector<8x256xf32>
    %c32 = arith.constant 32 : index
    %c0_20 = arith.constant 0 : index
    %52 = vector.load %arg10[%c32, %c0_20] : memref<80x256xf32, #tpu.memory_space<vmem>>, vector<8x256xf32>
    tpu.vector_store %arg10[%c32, %c0_20], %51 {strides = array<i32>} : memref<80x256xf32, #tpu.memory_space<vmem>>, vector<8x256xf32>,
    %c255_i32 = arith.constant 255 : i32
    %53 = tpu.dynamic_rotate %25 by %c255_i32 dim 1 : vector<8x256xf32>, i32 -> vector<8x256xf32>
    %54 = arith.mulf %24, %53 : vector<8x256xf32>
    %c5 = arith.constant 5 : index
    %c0_21 = arith.constant 0 : index
    %55 = vector.load %arg5[%c5, %c0_21] : memref<9x256xf32, #tpu.memory_space<vmem>>, vector<1x256xf32>
    %56 = vector.broadcast %55 : vector<1x256xf32> to vector<8x256xf32>
    %57 = arith.mulf %54, %56 : vector<8x256xf32>
    %c40 = arith.constant 40 : index
    %c0_22 = arith.constant 0 : index
    %58 = vector.load %arg10[%c40, %c0_22] : memref<80x256xf32, #tpu.memory_space<vmem>>, vector<8x256xf32>
    tpu.vector_store %arg10[%c40, %c0_22], %57 {strides = array<i32>} : memref<80x256xf32, #tpu.memory_space<vmem>>, vector<8x256xf32>,
    %c241_i32 = arith.constant 241 : i32
    %59 = tpu.dynamic_rotate %25 by %c241_i32 dim 1 : vector<8x256xf32>, i32 -> vector<8x256xf32>
    %60 = arith.mulf %24, %59 : vector<8x256xf32>
    %c6 = arith.constant 6 : index
    %c0_23 = arith.constant 0 : index
    %61 = vector.load %arg5[%c6, %c0_23] : memref<9x256xf32, #tpu.memory_space<vmem>>, vector<1x256xf32>
    %62 = vector.broadcast %61 : vector<1x256xf32> to vector<8x256xf32>
    %63 = arith.mulf %60, %62 : vector<8x256xf32>
    %c48 = arith.constant 48 : index
    %c0_24 = arith.constant 0 : index
    %64 = vector.load %arg10[%c48, %c0_24] : memref<80x256xf32, #tpu.memory_space<vmem>>, vector<8x256xf32>
    tpu.vector_store %arg10[%c48, %c0_24], %63 {strides = array<i32>} : memref<80x256xf32, #tpu.memory_space<vmem>>, vector<8x256xf32>,
    %c240_i32 = arith.constant 240 : i32
    %65 = tpu.dynamic_rotate %25 by %c240_i32 dim 1 : vector<8x256xf32>, i32 -> vector<8x256xf32>
    %66 = arith.mulf %24, %65 : vector<8x256xf32>
    %c7 = arith.constant 7 : index
    %c0_25 = arith.constant 0 : index
    %67 = vector.load %arg5[%c7, %c0_25] : memref<9x256xf32, #tpu.memory_space<vmem>>, vector<1x256xf32>
    %68 = vector.broadcast %67 : vector<1x256xf32> to vector<8x256xf32>
    %69 = arith.mulf %66, %68 : vector<8x256xf32>
    %c56 = arith.constant 56 : index
    %c0_26 = arith.constant 0 : index
    %70 = vector.load %arg10[%c56, %c0_26] : memref<80x256xf32, #tpu.memory_space<vmem>>, vector<8x256xf32>
    tpu.vector_store %arg10[%c56, %c0_26], %69 {strides = array<i32>} : memref<80x256xf32, #tpu.memory_space<vmem>>, vector<8x256xf32>,
    %c239_i32 = arith.constant 239 : i32
    %71 = tpu.dynamic_rotate %25 by %c239_i32 dim 1 : vector<8x256xf32>, i32 -> vector<8x256xf32>
    %72 = arith.mulf %24, %71 : vector<8x256xf32>
    %c8_27 = arith.constant 8 : index
    %c0_28 = arith.constant 0 : index
    %73 = vector.load %arg5[%c8_27, %c0_28] : memref<9x256xf32, #tpu.memory_space<vmem>>, vector<1x256xf32>
    %74 = vector.broadcast %73 : vector<1x256xf32> to vector<8x256xf32>
    %75 = arith.mulf %72, %74 : vector<8x256xf32>
    %c64 = arith.constant 64 : index
    %c0_29 = arith.constant 0 : index
    %76 = vector.load %arg10[%c64, %c0_29] : memref<80x256xf32, #tpu.memory_space<vmem>>, vector<8x256xf32>
    tpu.vector_store %arg10[%c64, %c0_29], %75 {strides = array<i32>} : memref<80x256xf32, #tpu.memory_space<vmem>>, vector<8x256xf32>,
    %c72 = arith.constant 72 : index
    %c0_30 = arith.constant 0 : index
    %77 = vector.load %arg10[%c72, %c0_30] : memref<80x256xf32, #tpu.memory_space<vmem>>, vector<8x256xf32>
    tpu.vector_store %arg10[%c72, %c0_30], %24 {strides = array<i32>} : memref<80x256xf32, #tpu.memory_space<vmem>>, vector<8x256xf32>,
    %c0_31 = arith.constant 0 : index
    %c0_32 = arith.constant 0 : index
    %78 = vector.load %arg4[%c0_31, %c0_32] : memref<18x80xf32, #tpu.memory_space<vmem>>, vector<18x80xf32>
    %c0_33 = arith.constant 0 : index
    %c0_34 = arith.constant 0 : index
    %79 = vector.load %arg10[%c0_33, %c0_34] : memref<80x256xf32, #tpu.memory_space<vmem>>, vector<80x256xf32>
    %cst_35 = arith.constant dense<0.000000e+00> : vector<18x256xf32>
    %80 = tpu.matmul %78, %79, %cst_35 {dimension_numbers = #tpu.dot_dimension_numbers<[1], [0], [0], [1], [0, 0, 1, 1], [], []>} : vector<18x80xf32>, vector<80x256xf32>, vector<18x256xf32> -> vector<18x256xf32>
    %81 = vector.extract_strided_slice %80 {offsets = [0, 0], sizes = [9, 256], strides = [1, 1]} : vector<18x256xf32> to vector<9x256xf32>
    %cst_36 = arith.constant dense<0xFF800000> : vector<256xf32>
    %82 = vector.multi_reduction <maximumf>, %81, %cst_36 [0] : vector<9x256xf32> to vector<256xf32>
    %83 = vector.shape_cast %82 : vector<256xf32> to vector<1x256xf32>
    %84 = vector.broadcast %83 : vector<1x256xf32> to vector<9x256xf32>
    %85 = arith.subf %81, %84 : vector<9x256xf32>
    %86 = math.exp %85 : vector<9x256xf32>
    %cst_37 = arith.constant dense<0.000000e+00> : vector<256xf32>
    %87 = vector.multi_reduction <add>, %86, %cst_37 [0] : vector<9x256xf32> to vector<256xf32>
    %88 = vector.shape_cast %87 : vector<256xf32> to vector<1x256xf32>
    %cst_38 = arith.constant 1.000000e+00 : f32
    %89 = vector.broadcast %cst_38 : f32 to vector<1x256xf32>
    %90 = arith.divf %89, %88 : vector<1x256xf32>
    %91 = vector.broadcast %90 : vector<1x256xf32> to vector<9x256xf32>
    %92 = arith.mulf %86, %91 : vector<9x256xf32>
    %cst_39 = arith.constant 9.99999993E-9 : f32
    %93 = vector.broadcast %cst_39 : f32 to vector<9x256xf32>
    %94 = arith.addf %92, %93 : vector<9x256xf32>
    %c0_40 = arith.constant 0 : index
    %c0_41 = arith.constant 0 : index
    %95 = vector.load %arg5[%c0_40, %c0_41] : memref<9x256xf32, #tpu.memory_space<vmem>>, vector<9x256xf32>
    %96 = arith.mulf %94, %95 : vector<9x256xf32>
    %97 = vector.extract_strided_slice %80 {offsets = [9, 0], sizes = [9, 256], strides = [1, 1]} : vector<18x256xf32> to vector<9x256xf32>
    %cst_42 = arith.constant dense<0xFF800000> : vector<256xf32>
    %98 = vector.multi_reduction <maximumf>, %97, %cst_42 [0] : vector<9x256xf32> to vector<256xf32>
    %99 = vector.shape_cast %98 : vector<256xf32> to vector<1x256xf32>
    %100 = vector.broadcast %99 : vector<1x256xf32> to vector<9x256xf32>
    %101 = arith.subf %97, %100 : vector<9x256xf32>
    %102 = math.exp %101 : vector<9x256xf32>
    %cst_43 = arith.constant dense<0.000000e+00> : vector<256xf32>
    %103 = vector.multi_reduction <add>, %102, %cst_43 [0] : vector<9x256xf32> to vector<256xf32>
    %104 = vector.shape_cast %103 : vector<256xf32> to vector<1x256xf32>
    %cst_44 = arith.constant 1.000000e+00 : f32
    %105 = vector.broadcast %cst_44 : f32 to vector<1x256xf32>
    %106 = arith.divf %105, %104 : vector<1x256xf32>
    %107 = vector.broadcast %106 : vector<1x256xf32> to vector<9x256xf32>
    %108 = arith.mulf %102, %107 : vector<9x256xf32>
    %cst_45 = arith.constant 9.99999993E-9 : f32
    %109 = vector.broadcast %cst_45 : f32 to vector<9x256xf32>
    %110 = arith.addf %108, %109 : vector<9x256xf32>
    %c0_46 = arith.constant 0 : index
    %c0_47 = arith.constant 0 : index
    %111 = vector.load %arg5[%c0_46, %c0_47] : memref<9x256xf32, #tpu.memory_space<vmem>>, vector<9x256xf32>
    %112 = arith.mulf %110, %111 : vector<9x256xf32>
    %113 = tpu.concatenate %96, %112 in 0 : vector<9x256xf32>, vector<9x256xf32> -> vector<18x256xf32>
    %c0_48 = arith.constant 0 : index
    %c0_49 = arith.constant 0 : index
    %114 = vector.load %arg6[%c0_48, %c0_49] : memref<72x18xf32, #tpu.memory_space<vmem>>, vector<72x18xf32>
    %cst_50 = arith.constant dense<0.000000e+00> : vector<72x256xf32>
    %115 = tpu.matmul %114, %113, %cst_50 {dimension_numbers = #tpu.dot_dimension_numbers<[1], [0], [0], [1], [0, 0, 1, 1], [], []>} : vector<72x18xf32>, vector<18x256xf32>, vector<72x256xf32> -> vector<72x256xf32>
    %cst_51 = arith.constant 0.000000e+00 : f32
    %116 = vector.broadcast %cst_51 : f32 to vector<8x256xf32>
    %c17_i32_52 = arith.constant 17 : i32
    %117 = tpu.dynamic_rotate %26 by %c17_i32_52 dim 1 : vector<8x256xf32>, i32 -> vector<8x256xf32>
    %118 = vector.extract_strided_slice %115 {offsets = [0, 0], sizes = [8, 256], strides = [1, 1]} : vector<72x256xf32> to vector<8x256xf32>
    %119 = arith.mulf %118, %117 : vector<8x256xf32>
    %120 = arith.addf %116, %119 : vector<8x256xf32>
    %c16_i32_53 = arith.constant 16 : i32
    %121 = tpu.dynamic_rotate %26 by %c16_i32_53 dim 1 : vector<8x256xf32>, i32 -> vector<8x256xf32>
    %122 = vector.extract_strided_slice %115 {offsets = [8, 0], sizes = [8, 256], strides = [1, 1]} : vector<72x256xf32> to vector<8x256xf32>
    %123 = arith.mulf %122, %121 : vector<8x256xf32>
    %124 = arith.addf %120, %123 : vector<8x256xf32>
    %c15_i32_54 = arith.constant 15 : i32
    %125 = tpu.dynamic_rotate %26 by %c15_i32_54 dim 1 : vector<8x256xf32>, i32 -> vector<8x256xf32>
    %126 = vector.extract_strided_slice %115 {offsets = [16, 0], sizes = [8, 256], strides = [1, 1]} : vector<72x256xf32> to vector<8x256xf32>
    %127 = arith.mulf %126, %125 : vector<8x256xf32>
    %128 = arith.addf %124, %127 : vector<8x256xf32>
    %c1_i32_55 = arith.constant 1 : i32
    %129 = tpu.dynamic_rotate %26 by %c1_i32_55 dim 1 : vector<8x256xf32>, i32 -> vector<8x256xf32>
    %130 = vector.extract_strided_slice %115 {offsets = [24, 0], sizes = [8, 256], strides = [1, 1]} : vector<72x256xf32> to vector<8x256xf32>
    %131 = arith.mulf %130, %129 : vector<8x256xf32>
    %132 = arith.addf %128, %131 : vector<8x256xf32>
    %133 = vector.extract_strided_slice %115 {offsets = [32, 0], sizes = [8, 256], strides = [1, 1]} : vector<72x256xf32> to vector<8x256xf32>
    %134 = arith.mulf %133, %26 : vector<8x256xf32>
    %135 = arith.addf %132, %134 : vector<8x256xf32>
    %c255_i32_56 = arith.constant 255 : i32
    %136 = tpu.dynamic_rotate %26 by %c255_i32_56 dim 1 : vector<8x256xf32>, i32 -> vector<8x256xf32>
    %137 = vector.extract_strided_slice %115 {offsets = [40, 0], sizes = [8, 256], strides = [1, 1]} : vector<72x256xf32> to vector<8x256xf32>
    %138 = arith.mulf %137, %136 : vector<8x256xf32>
    %139 = arith.addf %135, %138 : vector<8x256xf32>
    %c241_i32_57 = arith.constant 241 : i32
    %140 = tpu.dynamic_rotate %26 by %c241_i32_57 dim 1 : vector<8x256xf32>, i32 -> vector<8x256xf32>
    %141 = vector.extract_strided_slice %115 {offsets = [48, 0], sizes = [8, 256], strides = [1, 1]} : vector<72x256xf32> to vector<8x256xf32>
    %142 = arith.mulf %141, %140 : vector<8x256xf32>
    %143 = arith.addf %139, %142 : vector<8x256xf32>
    %c240_i32_58 = arith.constant 240 : i32
    %144 = tpu.dynamic_rotate %26 by %c240_i32_58 dim 1 : vector<8x256xf32>, i32 -> vector<8x256xf32>
    %145 = vector.extract_strided_slice %115 {offsets = [56, 0], sizes = [8, 256], strides = [1, 1]} : vector<72x256xf32> to vector<8x256xf32>
    %146 = arith.mulf %145, %144 : vector<8x256xf32>
    %147 = arith.addf %143, %146 : vector<8x256xf32>
    %c239_i32_59 = arith.constant 239 : i32
    %148 = tpu.dynamic_rotate %26 by %c239_i32_59 dim 1 : vector<8x256xf32>, i32 -> vector<8x256xf32>
    %149 = vector.extract_strided_slice %115 {offsets = [64, 0], sizes = [8, 256], strides = [1, 1]} : vector<72x256xf32> to vector<8x256xf32>
    %150 = arith.mulf %149, %148 : vector<8x256xf32>
    %151 = arith.addf %147, %150 : vector<8x256xf32>
    %c0_60 = arith.constant 0 : index
    %c0_61 = arith.constant 0 : index
    %152 = vector.load %arg7[%c0_60, %c0_61] : memref<8x8xf32, #tpu.memory_space<vmem>>, vector<8x8xf32>
    %cst_62 = arith.constant dense<0.000000e+00> : vector<8x256xf32>
    %153 = tpu.matmul %152, %151, %cst_62 {dimension_numbers = #tpu.dot_dimension_numbers<[1], [0], [0], [1], [0, 0, 1, 1], [], []>} : vector<8x8xf32>, vector<8x256xf32>, vector<8x256xf32> -> vector<8x256xf32>
    %c0_63 = arith.constant 0 : index
    %c0_64 = arith.constant 0 : index
    %154 = vector.load %arg8[%c0_63, %c0_64] : memref<8x1xf32, #tpu.memory_space<vmem>>, vector<8x1xf32>
    %155 = vector.broadcast %154 : vector<8x1xf32> to vector<8x256xf32>
    %156 = arith.addf %153, %155 : vector<8x256xf32>
    %c0_65 = arith.constant 0 : index
    %c0_66 = arith.constant 0 : index
    %157 = vector.load %arg9[%c0_65, %c0_66] : memref<8x256xf32, #tpu.memory_space<vmem>>, vector<8x256xf32>
    tpu.vector_store %arg9[%c0_65, %c0_66], %156 {strides = array<i32>} : memref<8x256xf32, #tpu.memory_space<vmem>>, vector<8x256xf32>,
    return
  }
  func.func @transform_0(%arg0: i32) -> (i32, i32) {
    %c0_i32 = arith.constant 0 : i32
    %c0_i32_0 = arith.constant 0 : i32
    return %c0_i32, %arg0 : i32, i32
  }
  func.func @transform_1(%arg0: i32) -> (i32, i32) {
    %c0_i32 = arith.constant 0 : i32
    %c0_i32_0 = arith.constant 0 : i32
    %c0_i32_1 = arith.constant 0 : i32
    return %c0_i32, %c0_i32_0 : i32, i32
  }
  func.func @transform_2(%arg0: i32) -> (i32, i32) {
    %c0_i32 = arith.constant 0 : i32
    %c0_i32_0 = arith.constant 0 : i32
    %c0_i32_1 = arith.constant 0 : i32
    return %c0_i32, %c0_i32_0 : i32, i32
  }
  func.func @transform_3(%arg0: i32) -> (i32, i32) {
    %c0_i32 = arith.constant 0 : i32
    %c0_i32_0 = arith.constant 0 : i32
    %c0_i32_1 = arith.constant 0 : i32
    return %c0_i32, %c0_i32_0 : i32, i32
  }
  func.func @transform_4(%arg0: i32) -> (i32, i32) {
    %c0_i32 = arith.constant 0 : i32
    %c0_i32_0 = arith.constant 0 : i32
    %c0_i32_1 = arith.constant 0 : i32
    return %c0_i32, %c0_i32_0 : i32, i32
  }
  func.func @transform_5(%arg0: i32) -> (i32, i32) {
    %c0_i32 = arith.constant 0 : i32
    %c0_i32_0 = arith.constant 0 : i32
    %c0_i32_1 = arith.constant 0 : i32
    return %c0_i32, %c0_i32_0 : i32, i32
  }
  func.func @transform_6(%arg0: i32) -> (i32, i32) {
    %c0_i32 = arith.constant 0 : i32
    %c0_i32_0 = arith.constant 0 : i32
    %c0_i32_1 = arith.constant 0 : i32
    return %c0_i32, %c0_i32_0 : i32, i32
  }
  func.func @transform_7(%arg0: i32) -> (i32, i32) {
    %c0_i32 = arith.constant 0 : i32
    %c0_i32_0 = arith.constant 0 : i32
    %c0_i32_1 = arith.constant 0 : i32
    return %c0_i32, %c0_i32_0 : i32, i32
  }
  func.func @transform_8(%arg0: i32) -> (i32, i32) {
    %c0_i32 = arith.constant 0 : i32
    %c0_i32_0 = arith.constant 0 : i32
    return %c0_i32, %arg0 : i32, i32
  }
}

</mosaic_0001>

<llo_original>
// kernel: tpu_custom_call.1
$region0: #{tpu_custom_call.1}
  #allocation0 [shape = 'u32[]', space=smem, size = 0x4, offset = 0x4, fixed_abs, tag = 'smem constant byte address 0x4 - core index']
  #allocation1 [shape = 'u32[144,128]{1,0:T(1,128)}', space=vmem, size = 0x12000, scoped, tag = 'internal scratch']
  #allocation2 [shape = 'f32[80,256]{1,0:T(8,128)}', space=vmem, size = 0x14000, scoped, tag = 'scratch operand']
  %s0 = inlined_call_operand.vmem [shape: f32[8,512], index: 0, kind: input, shape index: {}]
  %s1 = inlined_call_operand.vmem [shape: f32[24,8], index: 1, kind: input, shape index: {}]
  %s2 = inlined_call_operand.vmem [shape: f32[24,1], index: 2, kind: input, shape index: {}]
  %s3 = inlined_call_operand.vmem [shape: f32[18,80], index: 3, kind: input, shape index: {}]
  %s4 = inlined_call_operand.vmem [shape: f32[9,256], index: 4, kind: input, shape index: {}]
  %s5 = inlined_call_operand.vmem [shape: f32[72,18], index: 5, kind: input, shape index: {}]
  %s6 = inlined_call_operand.vmem [shape: f32[8,8], index: 6, kind: input, shape index: {}]
  %s7 = inlined_call_operand.vmem [shape: f32[8,1], index: 7, kind: input, shape index: {}]
  %s8 = inlined_call_operand.hbm [shape: f32[8,512], index: 8, kind: output, shape index: {}]
  %s9 = sld [smem:[#allocation0]]
  $region65: #{tpu_custom_call.1} parent=0
    _
  %s11 = ssub.s32 1, %s9
  %s12 = scalar_select 0, %s11, %s9
  $region1: #{tpu_custom_call.1} parent=0
    #allocation3 [shape = 'u8[16384]{0}', space=vmem, size = 0x4000, scoped, tag = 'output window, operand 0']
    #allocation4 [shape = 's32[2]{0}', space=sflag, size = 0x8, scoped, tag = 'scoped memory for tpu_custom_call.1']
    %13 = vsyncpa [#allocation4], 0
    %s14 = scalar_lea.sflag [#allocation4], 1
    %15 = vsyncpa %s14, 0
    loop: start=0, step=1, limit=4
    $region2: #{tpu_custom_call.1} parent=1 // loop_pre_header
      _
    $region3: #{tpu_custom_call.1} parent=1 // loop_header
      %s17 = sphi 0, %s21
      %p18 = scmp.ge.s32.totalorder %s17, 4
      %s27 = sphi 0, %s29
      %s30 = sphi 0, %s27
      %s31 = sphi 0, %s30
      %s47 = sphi 0, %s31
      %s51 = sphi 0, %s51
      %s53 = sphi 0, %s51
      %s54 = sphi 0, %s53
      %s68 = sphi 0, %s54
      %s72 = sphi 0, %s72
      %s74 = sphi 0, %s72
      %s75 = sphi 0, %s74
      %s89 = sphi 0, %s75
      %s93 = sphi 0, %s93
      %s95 = sphi 0, %s93
      %s96 = sphi 0, %s95
      %s110 = sphi 0, %s96
      %s114 = sphi 0, %s114
      %s116 = sphi 0, %s114
      %s117 = sphi 0, %s116
      %s131 = sphi 0, %s117
      %s135 = sphi 0, %s135
      %s137 = sphi 0, %s135
      %s138 = sphi 0, %s137
      %s152 = sphi 0, %s138
      %s156 = sphi 0, %s156
      %s158 = sphi 0, %s156
      %s159 = sphi 0, %s158
      %s173 = sphi 0, %s159
      %s177 = sphi 0, %s177
      %s179 = sphi 0, %s177
      %s180 = sphi 0, %s179
      %s194 = sphi 0, %s180
      %s200 = sphi 0, %s202
      %s203 = sphi 0, %s200
      %s204 = sphi 0, %s203
      %s220 = sphi 0, %s204
    $region4: #{tpu_custom_call.1} parent=1 // loop_header_branch
      %20 = sbr.rel (%p18) target = $region8
    $region5: #{tpu_custom_call.1} parent=1 // loop_body
      %s22 = ssub.s32 %s17, 1
      %s23 = ssub.s32 %s17, 2
      %s24 = sadd.s32 %s17, 1
      %s25 = ssub.s32 %s17, %s24
      %p26 = scmp.eq.s32.totalorder %s25, 0
      %s28 = sadd.s32 %s27, 1
      %s29 = scalar_select %p26, %s27, %s28
      %p32 = pneg %p26
      %p33 = scmp.eq.s32.totalorder %s17, 1
      %p34 = por %p32, %p33
      %p35 = scmp.ne.s32.totalorder %s27, %s30
      %p36 = scmp.eq.s32.totalorder %s17, 0
      %p37 = por %p35, %p36
      %p38 = scmp.ne.s32.totalorder %s27, %s30
      %p39 = scmp.eq.s32.totalorder %s22, 1
      %p40 = por %p38, %p39
      %p41 = scmp.ne.s32.totalorder %s30, %s31
      %p42 = scmp.eq.s32.totalorder %s22, 0
      %p43 = por %p41, %p42
      %p44 = scmp.ne.s32.totalorder %s30, %s31
      %p45 = scmp.eq.s32.totalorder %s23, 1
      %p46 = por %p44, %p45
      %p48 = scmp.ne.s32.totalorder %s31, %s47
      %p49 = scmp.eq.s32.totalorder %s23, 0
      %p50 = por %p48, %p49
      %s52 = sadd.s32 %s51, 1
      %p55 = scmp.eq.s32.totalorder %s17, 1
      %p56 = scmp.ne.s32.totalorder %s51, %s53
      %p57 = scmp.eq.s32.totalorder %s17, 0
      %p58 = por %p56, %p57
      %p59 = scmp.ne.s32.totalorder %s51, %s53
      %p60 = scmp.eq.s32.totalorder %s22, 1
      %p61 = por %p59, %p60
      %p62 = scmp.ne.s32.totalorder %s53, %s54
      %p63 = scmp.eq.s32.totalorder %s22, 0
      %p64 = por %p62, %p63
      %p65 = scmp.ne.s32.totalorder %s53, %s54
      %p66 = scmp.eq.s32.totalorder %s23, 1
      %p67 = por %p65, %p66
      %p69 = scmp.ne.s32.totalorder %s54, %s68
      %p70 = scmp.eq.s32.totalorder %s23, 0
      %p71 = por %p69, %p70
      %s73 = sadd.s32 %s72, 1
      %p76 = scmp.eq.s32.totalorder %s17, 1
      %p77 = scmp.ne.s32.totalorder %s72, %s74
      %p78 = scmp.eq.s32.totalorder %s17, 0
      %p79 = por %p77, %p78
      %p80 = scmp.ne.s32.totalorder %s72, %s74
      %p81 = scmp.eq.s32.totalorder %s22, 1
      %p82 = por %p80, %p81
      %p83 = scmp.ne.s32.totalorder %s74, %s75
      %p84 = scmp.eq.s32.totalorder %s22, 0
      %p85 = por %p83, %p84
      %p86 = scmp.ne.s32.totalorder %s74, %s75
      %p87 = scmp.eq.s32.totalorder %s23, 1
      %p88 = por %p86, %p87
      %p90 = scmp.ne.s32.totalorder %s75, %s89
      %p91 = scmp.eq.s32.totalorder %s23, 0
      %p92 = por %p90, %p91
      %s94 = sadd.s32 %s93, 1
      %p97 = scmp.eq.s32.totalorder %s17, 1
      %p98 = scmp.ne.s32.totalorder %s93, %s95
      %p99 = scmp.eq.s32.totalorder %s17, 0
      %p100 = por %p98, %p99
      %p101 = scmp.ne.s32.totalorder %s93, %s95
      %p102 = scmp.eq.s32.totalorder %s22, 1
      %p103 = por %p101, %p102
      %p104 = scmp.ne.s32.totalorder %s95, %s96
      %p105 = scmp.eq.s32.totalorder %s22, 0
      %p106 = por %p104, %p105
      %p107 = scmp.ne.s32.totalorder %s95, %s96
      %p108 = scmp.eq.s32.totalorder %s23, 1
      %p109 = por %p107, %p108
      %p111 = scmp.ne.s32.totalorder %s96, %s110
      %p112 = scmp.eq.s32.totalorder %s23, 0
      %p113 = por %p111, %p112
      %s115 = sadd.s32 %s114, 1
      %p118 = scmp.eq.s32.totalorder %s17, 1
      %p119 = scmp.ne.s32.totalorder %s114, %s116
      %p120 = scmp.eq.s32.totalorder %s17, 0
      %p121 = por %p119, %p120
      %p122 = scmp.ne.s32.totalorder %s114, %s116
      %p123 = scmp.eq.s32.totalorder %s22, 1
      %p124 = por %p122, %p123
      %p125 = scmp.ne.s32.totalorder %s116, %s117
      %p126 = scmp.eq.s32.totalorder %s22, 0
      %p127 = por %p125, %p126
      %p128 = scmp.ne.s32.totalorder %s116, %s117
      %p129 = scmp.eq.s32.totalorder %s23, 1
      %p130 = por %p128, %p129
      %p132 = scmp.ne.s32.totalorder %s117, %s131
      %p133 = scmp.eq.s32.totalorder %s23, 0
      %p134 = por %p132, %p133
      %s136 = sadd.s32 %s135, 1
      %p139 = scmp.eq.s32.totalorder %s17, 1
      %p140 = scmp.ne.s32.totalorder %s135, %s137
      %p141 = scmp.eq.s32.totalorder %s17, 0
      %p142 = por %p140, %p141
      %p143 = scmp.ne.s32.totalorder %s135, %s137
      %p144 = scmp.eq.s32.totalorder %s22, 1
      %p145 = por %p143, %p144
      %p146 = scmp.ne.s32.totalorder %s137, %s138
      %p147 = scmp.eq.s32.totalorder %s22, 0
      %p148 = por %p146, %p147
      %p149 = scmp.ne.s32.totalorder %s137, %s138
      %p150 = scmp.eq.s32.totalorder %s23, 1
      %p151 = por %p149, %p150
      %p153 = scmp.ne.s32.totalorder %s138, %s152
      %p154 = scmp.eq.s32.totalorder %s23, 0
      %p155 = por %p153, %p154
      %s157 = sadd.s32 %s156, 1
      %p160 = scmp.eq.s32.totalorder %s17, 1
      %p161 = scmp.ne.s32.totalorder %s156, %s158
      %p162 = scmp.eq.s32.totalorder %s17, 0
      %p163 = por %p161, %p162
      %p164 = scmp.ne.s32.totalorder %s156, %s158
      %p165 = scmp.eq.s32.totalorder %s22, 1
      %p166 = por %p164, %p165
      %p167 = scmp.ne.s32.totalorder %s158, %s159
      %p168 = scmp.eq.s32.totalorder %s22, 0
      %p169 = por %p167, %p168
      %p170 = scmp.ne.s32.totalorder %s158, %s159
      %p171 = scmp.eq.s32.totalorder %s23, 1
      %p172 = por %p170, %p171
      %p174 = scmp.ne.s32.totalorder %s159, %s173
      %p175 = scmp.eq.s32.totalorder %s23, 0
      %p176 = por %p174, %p175
      %s178 = sadd.s32 %s177, 1
      %p181 = scmp.eq.s32.totalorder %s17, 1
      %p182 = scmp.ne.s32.totalorder %s177, %s179
      %p183 = scmp.eq.s32.totalorder %s17, 0
      %p184 = por %p182, %p183
      %p185 = scmp.ne.s32.totalorder %s177, %s179
      %p186 = scmp.eq.s32.totalorder %s22, 1
      %p187 = por %p185, %p186
      %p188 = scmp.ne.s32.totalorder %s179, %s180
      %p189 = scmp.eq.s32.totalorder %s22, 0
      %p190 = por %p188, %p189
      %p191 = scmp.ne.s32.totalorder %s179, %s180
      %p192 = scmp.eq.s32.totalorder %s23, 1
      %p193 = por %p191, %p192
      %p195 = scmp.ne.s32.totalorder %s180, %s194
      %p196 = scmp.eq.s32.totalorder %s23, 0
      %p197 = por %p195, %p196
      %s198 = ssub.s32 %s17, %s24
      %p199 = scmp.eq.s32.totalorder %s198, 0
      %s201 = sadd.s32 %s200, 1
      %s202 = scalar_select %p199, %s200, %s201
      %p205 = pneg %p199
      %p206 = scmp.eq.s32.totalorder %s17, 1
      %p207 = por %p205, %p206
      %p208 = scmp.ne.s32.totalorder %s200, %s203
      %p209 = scmp.eq.s32.totalorder %s17, 0
      %p210 = por %p208, %p209
      %p211 = scmp.ne.s32.totalorder %s200, %s203
      %p212 = scmp.eq.s32.totalorder %s22, 1
      %p213 = por %p211, %p212
      %p214 = scmp.ne.s32.totalorder %s203, %s204
      %p215 = scmp.eq.s32.totalorder %s22, 0
      %p216 = por %p214, %p215
      %p217 = scmp.ne.s32.totalorder %s203, %s204
      %p218 = scmp.eq.s32.totalorder %s23, 1
      %p219 = por %p217, %p218
      %p221 = scmp.ne.s32.totalorder %s204, %s220
      %p222 = scmp.eq.s32.totalorder %s23, 0
      %p223 = por %p221, %p222
      %p224 = scmp.le.s32.totalorder 1, %s17
      %p225 = scmp.lt.s32.totalorder %s17, 3
      %p226 = pnand %p224, %p225
      %p227 = pneg %p226
      // Predicated region
      $region9: #{tpu_custom_call.1} parent=5 // pred_check
        _
      $region10: #{tpu_custom_call.1} parent=5 // pred_check_branch
        %229 = sbr.rel (%p226) target = $region12
      $region11: #{tpu_custom_call.1} parent=5 // pred_region
        %s230 = ssub.s32 %s17, 1
        // Predicated region
        $region13: #{tpu_custom_call.1} parent=11 // pred_check
          %p231 = pneg %p64
        $region14: #{tpu_custom_call.1} parent=11 // pred_check_branch
          %233 = sbr.rel (%p231) target = $region16
        $region15: #{tpu_custom_call.1} parent=11 // pred_region
          _
        $region16: #{tpu_custom_call.1} parent=11 // pred_fallthru
          _
        // Predicated region
        $region17: #{tpu_custom_call.1} parent=11 // pred_check
          %p234 = pneg %p85
        $region18: #{tpu_custom_call.1} parent=11 // pred_check_branch
          %236 = sbr.rel (%p234) target = $region20
        $region19: #{tpu_custom_call.1} parent=11 // pred_region
          _
        $region20: #{tpu_custom_call.1} parent=11 // pred_fallthru
          _
        // Predicated region
        $region21: #{tpu_custom_call.1} parent=11 // pred_check
          %p237 = pneg %p106
        $region22: #{tpu_custom_call.1} parent=11 // pred_check_branch
          %239 = sbr.rel (%p237) target = $region24
        $region23: #{tpu_custom_call.1} parent=11 // pred_region
          _
        $region24: #{tpu_custom_call.1} parent=11 // pred_fallthru
          _
        // Predicated region
        $region25: #{tpu_custom_call.1} parent=11 // pred_check
          %p240 = pneg %p127
        $region26: #{tpu_custom_call.1} parent=11 // pred_check_branch
          %242 = sbr.rel (%p240) target = $region28
        $region27: #{tpu_custom_call.1} parent=11 // pred_region
          _
        $region28: #{tpu_custom_call.1} parent=11 // pred_fallthru
          _
        // Predicated region
        $region29: #{tpu_custom_call.1} parent=11 // pred_check
          %p243 = pneg %p148
        $region30: #{tpu_custom_call.1} parent=11 // pred_check_branch
          %245 = sbr.rel (%p243) target = $region32
        $region31: #{tpu_custom_call.1} parent=11 // pred_region
          _
        $region32: #{tpu_custom_call.1} parent=11 // pred_fallthru
          _
        // Predicated region
        $region33: #{tpu_custom_call.1} parent=11 // pred_check
          %p246 = pneg %p169
        $region34: #{tpu_custom_call.1} parent=11 // pred_check_branch
          %248 = sbr.rel (%p246) target = $region36
        $region35: #{tpu_custom_call.1} parent=11 // pred_region
          _
        $region36: #{tpu_custom_call.1} parent=11 // pred_fallthru
          _
        // Predicated region
        $region37: #{tpu_custom_call.1} parent=11 // pred_check
          %p249 = pneg %p190
        $region38: #{tpu_custom_call.1} parent=11 // pred_check_branch
          %251 = sbr.rel (%p249) target = $region40
        $region39: #{tpu_custom_call.1} parent=11 // pred_region
          _
        $region40: #{tpu_custom_call.1} parent=11 // pred_fallthru
          _
      $region12: #{tpu_custom_call.1} parent=5 // pred_fallthru
        _
      %p252 = scmp.lt.s32.totalorder %s17, 2
      // Predicated region
      $region41: #{tpu_custom_call.1} parent=5 // pred_check
        %p253 = pneg %p252
      $region42: #{tpu_custom_call.1} parent=5 // pred_check_branch
        %255 = sbr.rel (%p253) target = $region44
      $region43: #{tpu_custom_call.1} parent=5 // pred_region
        // Predicated region
        $region45: #{tpu_custom_call.1} parent=43 // pred_check
          %p256 = pneg %p37
        $region46: #{tpu_custom_call.1} parent=43 // pred_check_branch
          %258 = sbr.rel (%p256) target = $region48
        $region47: #{tpu_custom_call.1} parent=43 // pred_region
          %s259 = smul.u32 2, %s17
          %p260 = scmp.lt.s32.totalorder %s259, 3
          %s261 = scalar_select %p260, %s259, 3
          %s262 = smul.addr %s261, 8
          %s263 = scalar_lea.vmem %s0, %s262
          %s264 = smul.u32 2, %s17
        $region48: #{tpu_custom_call.1} parent=43 // pred_fallthru
          _
      $region44: #{tpu_custom_call.1} parent=5 // pred_fallthru
        _
      %p265 = scmp.le.s32.totalorder 1, %s17
      %p266 = scmp.lt.s32.totalorder %s17, 3
      %p267 = pnand %p265, %p266
      %p268 = pneg %p267
      // Predicated region
      $region49: #{tpu_custom_call.1} parent=5 // pred_check
        _
      $region50: #{tpu_custom_call.1} parent=5 // pred_check_branch
        %270 = sbr.rel (%p267) target = $region52
      $region51: #{tpu_custom_call.1} parent=5 // pred_region
        %s271 = ssub.s32 %s17, 1
        %s272 = smul.u32 2, %s22
        %p273 = scmp.lt.s32.totalorder %s272, 3
        %s274 = scalar_select %p273, %s272, 3
        %s275 = smul.addr %s274, 8
        %s276 = scalar_lea.vmem %s0, %s275
        %p277 = pneg %p43
        %p278 = pneg %p40
        %p279 = pneg %p64
        %p280 = pneg %p61
        %p281 = pneg %p85
        %p282 = pneg %p82
        %p283 = pneg %p106
        %p284 = pneg %p103
        %p285 = pneg %p127
        %p286 = pneg %p124
        %p287 = pneg %p148
        %p288 = pneg %p145
        %p289 = pneg %p169
        %p290 = pneg %p166
        %p291 = pneg %p190
        %p292 = pneg %p187
        %p293 = pneg %p216
        %p294 = pneg %p213
        %s295 = sand.u32 %s203, 1
        %s296 = scalar_lea.sflag [#allocation4], %s295
        %s297 = sand.u32 %s203, 1
        %s298 = smul.addr %s297, 16
        %s299 = scalar_lea.vmem [#allocation3], %s298
        %s300 = smul.u32 2, %s22
        %p301 = scmp.lt.s32.totalorder %s300, 3
        %s302 = scalar_select %p301, %s300, 3
        %s303 = smul.addr %s302, 8
        %s304 = scalar_lea.vmem %s0, %s303
        %s305 = smul.u32 2, %s22
        %s306 = smul.u32 2, %s22
        %v307 = vld [vmem:[%s304] sm:$0xff]
        %v308 = vld [vmem:[%s304 + $0x8] sm:$0xff]
        %v309 = vrot.slane %v307, 4
        %v310 = vadd.f32 %v307, %v309
        %v311 = vrot.slane %v310, 2
        %v312 = vadd.f32 %v310, %v311
        %v313 = vrot.slane %v312, 1
        %v314 = vadd.f32 %v312, %v313
        %v315 = vrot.slane %v308, 4
        %v316 = vadd.f32 %v308, %v315
        %v317 = vrot.slane %v316, 2
        %v318 = vadd.f32 %v316, %v317
        %v319 = vrot.slane %v318, 1
        %v320 = vadd.f32 %v318, %v319
        %v321 = vrcp.pop 8.0
        %v322 = vmul.f32 %v314, %v321
        %v323 = vmul.f32 %v320, %v321
        %v324 = vsub.f32 %v307, %v322
        %v325 = vsub.f32 %v308, %v323
        %v326 = vmul.f32 %v324, %v324
        %v327 = vmul.f32 %v325, %v325
        %v328 = vrot.slane %v326, 4
        %v329 = vadd.f32 %v326, %v328
        %v330 = vrot.slane %v329, 2
        %v331 = vadd.f32 %v329, %v330
        %v332 = vrot.slane %v331, 1
        %v333 = vadd.f32 %v331, %v332
        %v334 = vrot.slane %v327, 4
        %v335 = vadd.f32 %v327, %v334
        %v336 = vrot.slane %v335, 2
        %v337 = vadd.f32 %v335, %v336
        %v338 = vrot.slane %v337, 1
        %v339 = vadd.f32 %v337, %v338
        %v340 = vmul.f32 %v333, %v321
        %v341 = vmul.f32 %v339, %v321
        %v342 = vadd.f32 %v340, 1e-05
        %v343 = vadd.f32 %v341, 1e-05
        %v344 = vrsqrt.pop %v342
        %v345 = vrsqrt.pop %v343
        %v346 = vmul.f32 %v324, %v344
        %v347 = vmul.f32 %v325, %v345
        %v348 = vld [vmem:[%s1] sm:$0xff]
        %v349 = vld [vmem:[%s1 + $0x8] sm:$0xff]
        %v350 = vld [vmem:[%s1 + $0x10] sm:$0xff]
        %v351 = vld [vmem:[%s2] sm:$0xff]
        %v352 = vld [vmem:[%s2 + $0x8] sm:$0xff]
        %v353 = vld [vmem:[%s2 + $0x10] sm:$0xff]
        %355 = vset.pattern.permute.xlu0 0
        %356 = vperm.xlu0 %355, %v351
        %v357 = vpop.permute.xlu0 %356
        %360 = vset.pattern.permute.xlu0 0
        %361 = vperm.xlu0 %360, %v352
        %v362 = vpop.permute.xlu0 %361
        %365 = vset.pattern.permute.xlu0 0
        %366 = vperm.xlu0 %365, %v353
        %v367 = vpop.permute.xlu0 %366
        %vm369 = vcmask 64512
        %v371 = vsel %vm369, %v348, 0
        %v374 = vsel %vm369, %v349, 0
        %v377 = vsel %vm369, %v350, 0
        %379 = vmatprep.subr.mxu0 0.0
        %380 = vmatpush1.msra.mxu0 0.0
        %381 = vmatprep.subr.mxu0 0.0
        %382 = vmatpush1.msra.mxu0 0.0
        %383 = vmatprep.subr.mxu0 0.0
        %384 = vmatpush1.msra.mxu0 0.0
        %385 = vmatprep.subr.mxu0 0.0
        %386 = vmatpush1.msra.mxu0 0.0
        %387 = vmatprep.subr.mxu0 0.0
        %388 = vmatpush1.msra.mxu0 0.0
        %389 = vmatprep.subr.mxu0 0.0
        %390 = vmatpush1.msra.mxu0 0.0
        %391 = vmatprep.subr.mxu0 0.0
        %392 = vmatpush1.msra.mxu0 0.0
        %393 = vmatprep.subr.mxu0 0.0
        %394 = vmatpush1.msra.mxu0 0.0
        %395 = vmatprep.subr.mxu0 0.0
        %396 = vmatpush1.msra.mxu0 0.0
        %397 = vmatprep.subr.mxu0 0.0
        %398 = vmatpush1.msra.mxu0 0.0
        %399 = vmatprep.subr.mxu0 0.0
        %400 = vmatpush1.msra.mxu0 0.0
        %401 = vmatprep.subr.mxu0 0.0
        %402 = vmatpush1.msra.mxu0 0.0
        %403 = vmatprep.subr.mxu0 0.0
        %404 = vmatpush1.msra.mxu0 0.0
        %405 = vmatprep.subr.mxu0 0.0
        %406 = vmatpush1.msra.mxu0 0.0
        %407 = vmatprep.subr.mxu0 0.0
        %408 = vmatpush1.msra.mxu0 0.0
        %409 = vmatprep.subr.mxu0 %v347
        %410 = vmatpush1.msra.mxu0 %v346
        %411 = vmatprep.subr.mxu0 0.0
        %412 = vmatpush2.msra.mxu0 0.0
        %413 = vmatprep.subr.mxu0 0.0
        %414 = vmatpush2.msra.mxu0 0.0
        %415 = vmatprep.subr.mxu0 0.0
        %416 = vmatpush2.msra.mxu0 0.0
        %417 = vmatprep.subr.mxu0 0.0
        %418 = vmatpush2.msra.mxu0 0.0
        %419 = vmatprep.subr.mxu0 0.0
        %420 = vmatpush2.msra.mxu0 0.0
        %421 = vmatprep.subr.mxu0 0.0
        %422 = vmatpush2.msra.mxu0 0.0
        %423 = vmatprep.subr.mxu0 0.0
        %424 = vmatpush2.msra.mxu0 0.0
        %425 = vmatprep.subr.mxu0 0.0
        %426 = vmatpush2.msra.mxu0 0.0
        %427 = vmatprep.subr.mxu0 0.0
        %428 = vmatpush2.msra.mxu0 0.0
        %429 = vmatprep.subr.mxu0 0.0
        %430 = vmatpush2.msra.mxu0 0.0
        %431 = vmatprep.subr.mxu0 0.0
        %432 = vmatpush2.msra.mxu0 0.0
        %433 = vmatprep.subr.mxu0 0.0
        %434 = vmatpush2.msra.mxu0 0.0
        %435 = vmatprep.subr.mxu0 0.0
        %436 = vmatpush2.msra.mxu0 0.0
        %437 = vmatprep.subr.mxu0 0.0
        %438 = vmatpush2.msra.mxu0 0.0
        %439 = vmatprep.subr.mxu0 0.0
        %440 = vmatpush2.msra.mxu0 0.0
        %441 = vmatprep.subr.mxu0 0.0
        %442 = vmatpush2.msra.mxu0 0.0
        %443 = vmatprep.mubr.f32.mxu0 0.0
        %444 = vmatmul.mubr.f32.gmra.mxu0 %v371
        %v445 = vpop.f32.mrf.mxu0
        %v446 = vadd.f32 %v357, %v445
        %v447 = vpop.f32.mrf.mxu0
        %v448 = vadd.f32 %v357, %v447
        %449 = vmatprep.mubr.f32.mxu0 0.0
        %450 = vmatmul.mubr.f32.gmra.mxu0 %v374
        %v451 = vpop.f32.mrf.mxu0
        %v452 = vadd.f32 %v362, %v451
        %v453 = vpop.f32.mrf.mxu0
        %v454 = vadd.f32 %v362, %v453
        %455 = vmatprep.mubr.f32.mxu0 0.0
        %456 = vmatmul.mubr.f32.gmra.mxu0 %v377
        %v457 = vpop.f32.mrf.mxu0
        %v458 = vadd.f32 %v367, %v457
        %v459 = vpop.f32.mrf.mxu0
        %v460 = vadd.f32 %v367, %v459
        %461 = vdwg.mxu0
        %462 = vrot.lane.b32.xlu0 %v452, 17
        %v463 = vpop.permute.xlu0 %462
        %464 = vrot.lane.b32.xlu0 %v454, 17
        %v465 = vpop.permute.xlu0 %464
        %v466 = vlaneseq
        %v467 = vand.u32 %v466, 127
        %vm468 = vcmp.lt.s32.totalorder %v467, 17
        %v469 = vsel %vm468, %v463, %v465
        %v470 = vsel %vm468, %v465, %v463
        %v471 = vmul.f32 %v446, %v470
        %v472 = vmul.f32 %v448, %v469
        %v473 = vld [vmem:[%s4] ss:$8 sm:$0x3]
        %v475 = vlaneseq
        %v476 = vshrl.u32 %v475, 7
        %v477 = vsub.s32 0, %v476
        %v478 = vrot.slane %v473, %v477
        %v479 = vlaneseq
        %v480 = vshrl.u32 %v479, 7
        %v481 = vsub.s32 1, %v480
        %v482 = vrot.slane %v473, %v481
        %v485 = vmul.f32 %v471, %v478
        %v486 = vmul.f32 %v472, %v482
        %487 = vst [vmem:[#allocation2] sm:$0xff] %v485
        %488 = vst [vmem:[#allocation2 + $0x8] sm:$0xff] %v486
        %489 = vrot.lane.b32.xlu0 %v452, 16
        %v490 = vpop.permute.xlu0 %489
        %491 = vrot.lane.b32.xlu0 %v454, 16
        %v492 = vpop.permute.xlu0 %491
        %vm493 = vcmp.lt.s32.totalorder %v467, 16
        %v494 = vsel %vm493, %v490, %v492
        %v495 = vsel %vm493, %v492, %v490
        %v496 = vmul.f32 %v446, %v495
        %v497 = vmul.f32 %v448, %v494
        %s498 = scalar_lea.vmem %s4, 1
        %v499 = vld [vmem:[%s498] ss:$8 sm:$0x3]
        %v501 = vlaneseq
        %v502 = vshrl.u32 %v501, 7
        %v503 = vsub.s32 0, %v502
        %v504 = vrot.slane %v499, %v503
        %v505 = vlaneseq
        %v506 = vshrl.u32 %v505, 7
        %v507 = vsub.s32 1, %v506
        %v508 = vrot.slane %v499, %v507
        %v511 = vmul.f32 %v496, %v504
        %v512 = vmul.f32 %v497, %v508
        %513 = vst [vmem:[#allocation2 + $0x10] sm:$0xff] %v511
        %514 = vst [vmem:[#allocation2 + $0x18] sm:$0xff] %v512
        %515 = vrot.lane.b32.xlu0 %v452, 15
        %v516 = vpop.permute.xlu0 %515
        %517 = vrot.lane.b32.xlu0 %v454, 15
        %v518 = vpop.permute.xlu0 %517
        %vm519 = vcmp.lt.s32.totalorder %v467, 15
        %v520 = vsel %vm519, %v516, %v518
        %v521 = vsel %vm519, %v518, %v516
        %v522 = vmul.f32 %v446, %v521
        %v523 = vmul.f32 %v448, %v520
        %s524 = scalar_lea.vmem %s4, 2
        %v525 = vld [vmem:[%s524] ss:$8 sm:$0x3]
        %v527 = vlaneseq
        %v528 = vshrl.u32 %v527, 7
        %v529 = vsub.s32 0, %v528
        %v530 = vrot.slane %v525, %v529
        %v531 = vlaneseq
        %v532 = vshrl.u32 %v531, 7
        %v533 = vsub.s32 1, %v532
        %v534 = vrot.slane %v525, %v533
        %v537 = vmul.f32 %v522, %v530
        %v538 = vmul.f32 %v523, %v534
        %539 = vst [vmem:[#allocation2 + $0x20] sm:$0xff] %v537
        %540 = vst [vmem:[#allocation2 + $0x28] sm:$0xff] %v538
        %541 = vrot.lane.b32.xlu0 %v452, 1
        %v542 = vpop.permute.xlu0 %541
        %543 = vrot.lane.b32.xlu0 %v454, 1
        %v544 = vpop.permute.xlu0 %543
        %vm545 = vcmp.lt.s32.totalorder %v467, 1
        %v546 = vsel %vm545, %v542, %v544
        %v547 = vsel %vm545, %v544, %v542
        %v548 = vmul.f32 %v446, %v547
        %v549 = vmul.f32 %v448, %v546
        %s550 = scalar_lea.vmem %s4, 3
        %v551 = vld [vmem:[%s550] ss:$8 sm:$0x3]
        %v553 = vlaneseq
        %v554 = vshrl.u32 %v553, 7
        %v555 = vsub.s32 0, %v554
        %v556 = vrot.slane %v551, %v555
        %v557 = vlaneseq
        %v558 = vshrl.u32 %v557, 7
        %v559 = vsub.s32 1, %v558
        %v560 = vrot.slane %v551, %v559
        %v563 = vmul.f32 %v548, %v556
        %v564 = vmul.f32 %v549, %v560
        %565 = vst [vmem:[#allocation2 + $0x30] sm:$0xff] %v563
        %566 = vst [vmem:[#allocation2 + $0x38] sm:$0xff] %v564
        %v567 = vmul.f32 %v446, %v452
        %v568 = vmul.f32 %v448, %v454
        %569 = vst [vmem:[#allocation2 + $0x40] sm:$0xff] %v567
        %570 = vst [vmem:[#allocation2 + $0x48] sm:$0xff] %v568
        %571 = vrot.lane.b32.xlu0 %v452, 127
        %v572 = vpop.permute.xlu0 %571
        %573 = vrot.lane.b32.xlu0 %v454, 127
        %v574 = vpop.permute.xlu0 %573
        %vm575 = vcmp.lt.s32.totalorder %v467, 127
        %v576 = vsel %vm575, %v572, %v574
        %v577 = vsel %vm575, %v574, %v572
        %v578 = vmul.f32 %v446, %v576
        %v579 = vmul.f32 %v448, %v577
        %s580 = scalar_lea.vmem %s4, 5
        %v581 = vld [vmem:[%s580] ss:$8 sm:$0x3]
        %v583 = vlaneseq
        %v584 = vshrl.u32 %v583, 7
        %v585 = vsub.s32 0, %v584
        %v586 = vrot.slane %v581, %v585
        %v587 = vlaneseq
        %v588 = vshrl.u32 %v587, 7
        %v589 = vsub.s32 1, %v588
        %v590 = vrot.slane %v581, %v589
        %v593 = vmul.f32 %v578, %v586
        %v594 = vmul.f32 %v579, %v590
        %595 = vst [vmem:[#allocation2 + $0x50] sm:$0xff] %v593
        %596 = vst [vmem:[#allocation2 + $0x58] sm:$0xff] %v594
        %597 = vrot.lane.b32.xlu0 %v452, 113
        %v598 = vpop.permute.xlu0 %597
        %599 = vrot.lane.b32.xlu0 %v454, 113
        %v600 = vpop.permute.xlu0 %599
        %vm601 = vcmp.lt.s32.totalorder %v467, 113
        %v602 = vsel %vm601, %v598, %v600
        %v603 = vsel %vm601, %v600, %v598
        %v604 = vmul.f32 %v446, %v602
        %v605 = vmul.f32 %v448, %v603
        %s606 = scalar_lea.vmem %s4, 6
        %v607 = vld [vmem:[%s606] ss:$8 sm:$0x3]
        %v609 = vlaneseq
        %v610 = vshrl.u32 %v609, 7
        %v611 = vsub.s32 0, %v610
        %v612 = vrot.slane %v607, %v611
        %v613 = vlaneseq
        %v614 = vshrl.u32 %v613, 7
        %v615 = vsub.s32 1, %v614
        %v616 = vrot.slane %v607, %v615
        %v619 = vmul.f32 %v604, %v612
        %v620 = vmul.f32 %v605, %v616
        %621 = vst [vmem:[#allocation2 + $0x60] sm:$0xff] %v619
        %622 = vst [vmem:[#allocation2 + $0x68] sm:$0xff] %v620
        %623 = vrot.lane.b32.xlu0 %v452, 112
        %v624 = vpop.permute.xlu0 %623
        %625 = vrot.lane.b32.xlu0 %v454, 112
        %v626 = vpop.permute.xlu0 %625
        %vm627 = vcmp.lt.s32.totalorder %v467, 112
        %v628 = vsel %vm627, %v624, %v626
        %v629 = vsel %vm627, %v626, %v624
        %v630 = vmul.f32 %v446, %v628
        %v631 = vmul.f32 %v448, %v629
        %s632 = scalar_lea.vmem %s4, 7
        %v633 = vld [vmem:[%s632] ss:$8 sm:$0x3]
        %v635 = vlaneseq
        %v636 = vshrl.u32 %v635, 7
        %v637 = vsub.s32 0, %v636
        %v638 = vrot.slane %v633, %v637
        %v639 = vlaneseq
        %v640 = vshrl.u32 %v639, 7
        %v641 = vsub.s32 1, %v640
        %v642 = vrot.slane %v633, %v641
        %v645 = vmul.f32 %v630, %v638
        %v646 = vmul.f32 %v631, %v642
        %647 = vst [vmem:[#allocation2 + $0x70] sm:$0xff] %v645
        %648 = vst [vmem:[#allocation2 + $0x78] sm:$0xff] %v646
        %649 = vrot.lane.b32.xlu0 %v452, 111
        %v650 = vpop.permute.xlu0 %649
        %651 = vrot.lane.b32.xlu0 %v454, 111
        %v652 = vpop.permute.xlu0 %651
        %vm653 = vcmp.lt.s32.totalorder %v467, 111
        %v654 = vsel %vm653, %v650, %v652
        %v655 = vsel %vm653, %v652, %v650
        %v656 = vmul.f32 %v446, %v654
        %v657 = vmul.f32 %v448, %v655
        %s658 = scalar_lea.vmem %s4, 16
        %v659 = vld [vmem:[%s658] ss:$8 sm:$0x3]
        %v661 = vlaneseq
        %v662 = vshrl.u32 %v661, 7
        %v663 = vsub.s32 0, %v662
        %v664 = vrot.slane %v659, %v663
        %v665 = vlaneseq
        %v666 = vshrl.u32 %v665, 7
        %v667 = vsub.s32 1, %v666
        %v668 = vrot.slane %v659, %v667
        %v671 = vmul.f32 %v656, %v664
        %v672 = vmul.f32 %v657, %v668
        %673 = vst [vmem:[#allocation2 + $0x80] sm:$0xff] %v671
        %674 = vst [vmem:[#allocation2 + $0x88] sm:$0xff] %v672
        %675 = vst [vmem:[#allocation2 + $0x90] sm:$0xff] %v446
        %676 = vst [vmem:[#allocation2 + $0x98] sm:$0xff] %v448
        %v677 = vld [vmem:[%s3] sm:$0xff]
        %v678 = vld [vmem:[%s3 + $0x8] sm:$0xff]
        %v679 = vld [vmem:[%s3 + $0x10] sm:$0x3]
        %v680 = vld [vmem:[#allocation2] sm:$0xff]
        %v681 = vld [vmem:[#allocation2 + $0x8] sm:$0xff]
        %v682 = vld [vmem:[#allocation2 + $0x10] sm:$0xff]
        %v683 = vld [vmem:[#allocation2 + $0x18] sm:$0xff]
        %v684 = vld [vmem:[#allocation2 + $0x20] sm:$0xff]
        %v685 = vld [vmem:[#allocation2 + $0x28] sm:$0xff]
        %v686 = vld [vmem:[#allocation2 + $0x30] sm:$0xff]
        %v687 = vld [vmem:[#allocation2 + $0x38] sm:$0xff]
        %v688 = vld [vmem:[#allocation2 + $0x40] sm:$0xff]
        %v689 = vld [vmem:[#allocation2 + $0x48] sm:$0xff]
        %v690 = vld [vmem:[#allocation2 + $0x50] sm:$0xff]
        %v691 = vld [vmem:[#allocation2 + $0x58] sm:$0xff]
        %v692 = vld [vmem:[#allocation2 + $0x60] sm:$0xff]
        %v693 = vld [vmem:[#allocation2 + $0x68] sm:$0xff]
        %v694 = vld [vmem:[#allocation2 + $0x70] sm:$0xff]
        %v695 = vld [vmem:[#allocation2 + $0x78] sm:$0xff]
        %v696 = vld [vmem:[#allocation2 + $0x80] sm:$0xff]
        %v697 = vld [vmem:[#allocation2 + $0x88] sm:$0xff]
        %v698 = vld [vmem:[#allocation2 + $0x90] sm:$0xff]
        %v699 = vld [vmem:[#allocation2 + $0x98] sm:$0xff]
        %vm700 = vcmask 654336
        %v702 = vsel %vm700, %v677, 0
        %v705 = vsel %vm700, %v678, 0
        %v708 = vsel %vm700, %v679, 0
        %710 = vmatprep.subr.mxu0 0.0
        %711 = vmatpush1.msra.mxu0 0.0
        %712 = vmatprep.subr.mxu0 0.0
        %713 = vmatpush1.msra.mxu0 0.0
        %714 = vmatprep.subr.mxu0 0.0
        %715 = vmatpush1.msra.mxu0 0.0
        %716 = vmatprep.subr.mxu0 0.0
        %717 = vmatpush1.msra.mxu0 0.0
        %718 = vmatprep.subr.mxu0 0.0
        %719 = vmatpush1.msra.mxu0 0.0
        %720 = vmatprep.subr.mxu0 0.0
        %721 = vmatpush1.msra.mxu0 0.0
        %722 = vmatprep.subr.mxu0 %v699
        %723 = vmatpush1.msra.mxu0 %v698
        %724 = vmatprep.subr.mxu0 %v697
        %725 = vmatpush1.msra.mxu0 %v696
        %726 = vmatprep.subr.mxu0 %v695
        %727 = vmatpush1.msra.mxu0 %v694
        %728 = vmatprep.subr.mxu0 %v693
        %729 = vmatpush1.msra.mxu0 %v692
        %730 = vmatprep.subr.mxu0 %v691
        %731 = vmatpush1.msra.mxu0 %v690
        %732 = vmatprep.subr.mxu0 %v689
        %733 = vmatpush1.msra.mxu0 %v688
        %734 = vmatprep.subr.mxu0 %v687
        %735 = vmatpush1.msra.mxu0 %v686
        %736 = vmatprep.subr.mxu0 %v685
        %737 = vmatpush1.msra.mxu0 %v684
        %738 = vmatprep.subr.mxu0 %v683
        %739 = vmatpush1.msra.mxu0 %v682
        %740 = vmatprep.subr.mxu0 %v681
        %741 = vmatpush1.msra.mxu0 %v680
        %742 = vmatprep.subr.mxu0 0.0
        %743 = vmatpush2.msra.mxu0 0.0
        %744 = vmatprep.subr.mxu0 0.0
        %745 = vmatpush2.msra.mxu0 0.0
        %746 = vmatprep.subr.mxu0 0.0
        %747 = vmatpush2.msra.mxu0 0.0
        %748 = vmatprep.subr.mxu0 0.0
        %749 = vmatpush2.msra.mxu0 0.0
        %750 = vmatprep.subr.mxu0 0.0
        %751 = vmatpush2.msra.mxu0 0.0
        %752 = vmatprep.subr.mxu0 0.0
        %753 = vmatpush2.msra.mxu0 0.0
        %754 = vmatprep.subr.mxu0 0.0
        %755 = vmatpush2.msra.mxu0 0.0
        %756 = vmatprep.subr.mxu0 0.0
        %757 = vmatpush2.msra.mxu0 0.0
        %758 = vmatprep.subr.mxu0 0.0
        %759 = vmatpush2.msra.mxu0 0.0
        %760 = vmatprep.subr.mxu0 0.0
        %761 = vmatpush2.msra.mxu0 0.0
        %762 = vmatprep.subr.mxu0 0.0
        %763 = vmatpush2.msra.mxu0 0.0
        %764 = vmatprep.subr.mxu0 0.0
        %765 = vmatpush2.msra.mxu0 0.0
        %766 = vmatprep.subr.mxu0 0.0
        %767 = vmatpush2.msra.mxu0 0.0
        %768 = vmatprep.subr.mxu0 0.0
        %769 = vmatpush2.msra.mxu0 0.0
        %770 = vmatprep.subr.mxu0 0.0
        %771 = vmatpush2.msra.mxu0 0.0
        %772 = vmatprep.subr.mxu0 0.0
        %773 = vmatpush2.msra.mxu0 0.0
        %774 = vmatprep.mubr.f32.mxu0 0.0
        %775 = vmatmul.mubr.f32.gmra.mxu0 %v702
        %v776 = vpop.f32.mrf.mxu0
        %v777 = vadd.f32 0.0, %v776
        %v778 = vpop.f32.mrf.mxu0
        %v779 = vadd.f32 0.0, %v778
        %780 = vmatprep.mubr.f32.mxu0 0.0
        %781 = vmatmul.mubr.f32.gmra.mxu0 %v705
        %v782 = vpop.f32.mrf.mxu0
        %v783 = vadd.f32 0.0, %v782
        %v784 = vpop.f32.mrf.mxu0
        %v785 = vadd.f32 0.0, %v784
        %786 = vmatprep.mubr.f32.mxu0 0.0
        %787 = vmatmul.mubr.f32.gmra.mxu0 %v708
        %v788 = vpop.f32.mrf.mxu0
        %v789 = vadd.f32 0.0, %v788
        %v790 = vpop.f32.mrf.mxu0
        %v791 = vadd.f32 0.0, %v790
        %792 = vdwg.mxu0
        %vm793 = vcmask 1040384
        %v794 = vsel %vm793, %v783, -inf
        %v795 = vmax.f32 %v777, %v794
        %v796 = vrot.slane %v795, 4
        %v797 = vmax.f32 %v795, %v796
        %v798 = vrot.slane %v797, 2
        %v799 = vmax.f32 %v797, %v798
        %v800 = vrot.slane %v799, 1
        %v801 = vmax.f32 %v799, %v800
        %v802 = vsel %vm793, %v785, -inf
        %v803 = vmax.f32 %v779, %v802
        %v804 = vrot.slane %v803, 4
        %v805 = vmax.f32 %v803, %v804
        %v806 = vrot.slane %v805, 2
        %v807 = vmax.f32 %v805, %v806
        %v808 = vrot.slane %v807, 1
        %v809 = vmax.f32 %v807, %v808
        %v810 = vsub.f32 %v777, %v801
        %v811 = vsub.f32 %v779, %v809
        %v812 = vsub.f32 %v783, %v801
        %v813 = vsub.f32 %v785, %v809
        %v814 = vmul.f32 %v810, 1.442695
        %v815 = vpow.pop %v814
        %v816 = vmul.f32 %v811, 1.442695
        %v817 = vpow.pop %v816
        %v818 = vmul.f32 %v812, 1.442695
        %v819 = vpow.pop %v818
        %v820 = vmul.f32 %v813, 1.442695
        %v821 = vpow.pop %v820
        %v822 = vsel %vm793, %v819, 0.0
        %v823 = vadd.f32 %v815, %v822
        %v824 = vrot.slane %v823, 4
        %v825 = vadd.f32 %v823, %v824
        %v826 = vrot.slane %v825, 2
        %v827 = vadd.f32 %v825, %v826
        %v828 = vrot.slane %v827, 1
        %v829 = vadd.f32 %v827, %v828
        %v830 = vsel %vm793, %v821, 0.0
        %v831 = vadd.f32 %v817, %v830
        %v832 = vrot.slane %v831, 4
        %v833 = vadd.f32 %v831, %v832
        %v834 = vrot.slane %v833, 2
        %v835 = vadd.f32 %v833, %v834
        %v836 = vrot.slane %v835, 1
        %v837 = vadd.f32 %v835, %v836
        %v838 = vrcp.pop %v829
        %v839 = vmul.f32 1.0, %v838
        %v840 = vrcp.pop %v837
        %v841 = vmul.f32 1.0, %v840
        %v842 = vmul.f32 %v815, %v839
        %v843 = vmul.f32 %v817, %v841
        %v844 = vmul.f32 %v819, %v839
        %v845 = vmul.f32 %v821, %v841
        %v846 = vadd.f32 %v842, 1e-08
        %v847 = vadd.f32 %v843, 1e-08
        %v848 = vadd.f32 %v844, 1e-08
        %v849 = vadd.f32 %v845, 1e-08
        %v850 = vld [vmem:[%s4] sm:$0xff]
        %v851 = vld [vmem:[%s4 + $0x8] sm:$0xff]
        %v852 = vld [vmem:[%s4 + $0x10] sm:$0x1]
        %v853 = vld [vmem:[%s4 + $0x18] sm:$0x1]
        %v854 = vmul.f32 %v846, %v850
        %v855 = vmul.f32 %v847, %v851
        %v856 = vmul.f32 %v848, %v852
        %v857 = vmul.f32 %v849, %v853
        %vm858 = vcmask 1047553
        %v859 = vsel %vm858, %v783, -inf
        %vm860 = vcmask 1041408
        %v861 = vsel %vm860, %v789, -inf
        %v862 = vmax.f32 %v859, %v861
        %v863 = vrot.slane %v862, 4
        %v864 = vmax.f32 %v862, %v863
        %v865 = vrot.slane %v864, 2
        %v866 = vmax.f32 %v864, %v865
        %v867 = vrot.slane %v866, 1
        %v868 = vmax.f32 %v866, %v867
        %v869 = vsel %vm858, %v785, -inf
        %v870 = vsel %vm860, %v791, -inf
        %v871 = vmax.f32 %v869, %v870
        %v872 = vrot.slane %v871, 4
        %v873 = vmax.f32 %v871, %v872
        %v874 = vrot.slane %v873, 2
        %v875 = vmax.f32 %v873, %v874
        %v876 = vrot.slane %v875, 1
        %v877 = vmax.f32 %v875, %v876
        %v878 = vsub.f32 %v783, %v868
        %v879 = vsub.f32 %v785, %v877
        %v880 = vsub.f32 %v789, %v868
        %v881 = vsub.f32 %v791, %v877
        %v882 = vmul.f32 %v878, 1.442695
        %v883 = vpow.pop %v882
        %v884 = vmul.f32 %v879, 1.442695
        %v885 = vpow.pop %v884
        %v886 = vmul.f32 %v880, 1.442695
        %v887 = vpow.pop %v886
        %v888 = vmul.f32 %v881, 1.442695
        %v889 = vpow.pop %v888
        %vm894 = vcmask 1046528
        %v895 = vrot.slane %v883, 1
        %v896 = vrot.slane %v887, 1
        %v897 = vsel %vm894, %v895, %v896
        %v898 = vrot.slane %v885, 1
        %v899 = vrot.slane %v889, 1
        %v900 = vsel %vm894, %v898, %v899
        %v905 = vsel %vm793, %v896, 0.0
        %v906 = vadd.f32 %v897, %v905
        %v907 = vrot.slane %v906, 4
        %v908 = vadd.f32 %v906, %v907
        %v909 = vrot.slane %v908, 2
        %v910 = vadd.f32 %v908, %v909
        %v911 = vrot.slane %v910, 1
        %v912 = vadd.f32 %v910, %v911
        %v913 = vsel %vm793, %v899, 0.0
        %v914 = vadd.f32 %v900, %v913
        %v915 = vrot.slane %v914, 4
        %v916 = vadd.f32 %v914, %v915
        %v917 = vrot.slane %v916, 2
        %v918 = vadd.f32 %v916, %v917
        %v919 = vrot.slane %v918, 1
        %v920 = vadd.f32 %v918, %v919
        %v921 = vrcp.pop %v912
        %v922 = vmul.f32 1.0, %v921
        %v923 = vrcp.pop %v920
        %v924 = vmul.f32 1.0, %v923
        %v925 = vmul.f32 %v883, %v922
        %v926 = vmul.f32 %v885, %v924
        %v927 = vmul.f32 %v887, %v922
        %v928 = vmul.f32 %v889, %v924
        %v929 = vadd.f32 %v925, 1e-08
        %v930 = vadd.f32 %v926, 1e-08
        %v931 = vadd.f32 %v927, 1e-08
        %v932 = vadd.f32 %v928, 1e-08
        %v937 = vrot.slane %v850, 7
        %v938 = vrot.slane %v851, 7
        %v939 = vrot.slane %v852, 7
        %v940 = vsel %vm793, %v937, %v939
        %v941 = vrot.slane %v853, 7
        %v942 = vsel %vm793, %v938, %v941
        %v947 = vmul.f32 %v929, %v937
        %v948 = vmul.f32 %v930, %v938
        %v949 = vmul.f32 %v931, %v940
        %v950 = vmul.f32 %v932, %v942
        %v951 = vsel %vm793, %v856, %v947
        %v952 = vsel %vm793, %v857, %v948
        %v953 = vld [vmem:[%s5] sm:$0xff]
        %v954 = vld [vmem:[%s5 + $0x8] sm:$0xff]
        %v955 = vld [vmem:[%s5 + $0x10] sm:$0xff]
        %v956 = vld [vmem:[%s5 + $0x18] sm:$0xff]
        %v957 = vld [vmem:[%s5 + $0x20] sm:$0xff]
        %v958 = vld [vmem:[%s5 + $0x28] sm:$0xff]
        %v959 = vld [vmem:[%s5 + $0x30] sm:$0xff]
        %v960 = vld [vmem:[%s5 + $0x38] sm:$0xff]
        %v961 = vld [vmem:[%s5 + $0x40] sm:$0xff]
        %vm962 = vcmask 146432
        %v964 = vsel %vm962, %v953, 0
        %v967 = vsel %vm962, %v954, 0
        %v970 = vsel %vm962, %v955, 0
        %v973 = vsel %vm962, %v956, 0
        %v976 = vsel %vm962, %v957, 0
        %v979 = vsel %vm962, %v958, 0
        %v982 = vsel %vm962, %v959, 0
        %v985 = vsel %vm962, %v960, 0
        %v988 = vsel %vm962, %v961, 0
        %v991 = vsel %vm860, %v949, 0
        %v994 = vsel %vm860, %v950, 0
        %996 = vmatprep.subr.mxu0 0.0
        %997 = vmatpush1.msra.mxu0 0.0
        %998 = vmatprep.subr.mxu0 0.0
        %999 = vmatpush1.msra.mxu0 0.0
        %1000 = vmatprep.subr.mxu0 0.0
        %1001 = vmatpush1.msra.mxu0 0.0
        %1002 = vmatprep.subr.mxu0 0.0
        %1003 = vmatpush1.msra.mxu0 0.0
        %1004 = vmatprep.subr.mxu0 0.0
        %1005 = vmatpush1.msra.mxu0 0.0
        %1006 = vmatprep.subr.mxu0 0.0
        %1007 = vmatpush1.msra.mxu0 0.0
        %1008 = vmatprep.subr.mxu0 0.0
        %1009 = vmatpush1.msra.mxu0 0.0
        %1010 = vmatprep.subr.mxu0 0.0
        %1011 = vmatpush1.msra.mxu0 0.0
        %1012 = vmatprep.subr.mxu0 0.0
        %1013 = vmatpush1.msra.mxu0 0.0
        %1014 = vmatprep.subr.mxu0 0.0
        %1015 = vmatpush1.msra.mxu0 0.0
        %1016 = vmatprep.subr.mxu0 0.0
        %1017 = vmatpush1.msra.mxu0 0.0
        %1018 = vmatprep.subr.mxu0 0.0
        %1019 = vmatpush1.msra.mxu0 0.0
        %1020 = vmatprep.subr.mxu0 0.0
        %1021 = vmatpush1.msra.mxu0 0.0
        %1022 = vmatprep.subr.mxu0 %v994
        %1023 = vmatpush1.msra.mxu0 %v991
        %1024 = vmatprep.subr.mxu0 %v952
        %1025 = vmatpush1.msra.mxu0 %v951
        %1026 = vmatprep.subr.mxu0 %v855
        %1027 = vmatpush1.msra.mxu0 %v854
        %1028 = vmatprep.subr.mxu0 0.0
        %1029 = vmatpush2.msra.mxu0 0.0
        %1030 = vmatprep.subr.mxu0 0.0
        %1031 = vmatpush2.msra.mxu0 0.0
        %1032 = vmatprep.subr.mxu0 0.0
        %1033 = vmatpush2.msra.mxu0 0.0
        %1034 = vmatprep.subr.mxu0 0.0
        %1035 = vmatpush2.msra.mxu0 0.0
        %1036 = vmatprep.subr.mxu0 0.0
        %1037 = vmatpush2.msra.mxu0 0.0
        %1038 = vmatprep.subr.mxu0 0.0
        %1039 = vmatpush2.msra.mxu0 0.0
        %1040 = vmatprep.subr.mxu0 0.0
        %1041 = vmatpush2.msra.mxu0 0.0
        %1042 = vmatprep.subr.mxu0 0.0
        %1043 = vmatpush2.msra.mxu0 0.0
        %1044 = vmatprep.subr.mxu0 0.0
        %1045 = vmatpush2.msra.mxu0 0.0
        %1046 = vmatprep.subr.mxu0 0.0
        %1047 = vmatpush2.msra.mxu0 0.0
        %1048 = vmatprep.subr.mxu0 0.0
        %1049 = vmatpush2.msra.mxu0 0.0
        %1050 = vmatprep.subr.mxu0 0.0
        %1051 = vmatpush2.msra.mxu0 0.0
        %1052 = vmatprep.subr.mxu0 0.0
        %1053 = vmatpush2.msra.mxu0 0.0
        %1054 = vmatprep.subr.mxu0 0.0
        %1055 = vmatpush2.msra.mxu0 0.0
        %1056 = vmatprep.subr.mxu0 0.0
        %1057 = vmatpush2.msra.mxu0 0.0
        %1058 = vmatprep.subr.mxu0 0.0
        %1059 = vmatpush2.msra.mxu0 0.0
        %1060 = vmatprep.mubr.f32.mxu0 0.0
        %1061 = vmatmul.mubr.f32.gmra.mxu0 %v964
        %v1062 = vpop.f32.mrf.mxu0
        %v1063 = vadd.f32 0.0, %v1062
        %v1064 = vpop.f32.mrf.mxu0
        %v1065 = vadd.f32 0.0, %v1064
        %1066 = vmatprep.mubr.f32.mxu0 0.0
        %1067 = vmatmul.mubr.f32.gmra.mxu0 %v967
        %v1068 = vpop.f32.mrf.mxu0
        %v1069 = vadd.f32 0.0, %v1068
        %v1070 = vpop.f32.mrf.mxu0
        %v1071 = vadd.f32 0.0, %v1070
        %1072 = vmatprep.mubr.f32.mxu0 0.0
        %1073 = vmatmul.mubr.f32.gmra.mxu0 %v970
        %v1074 = vpop.f32.mrf.mxu0
        %v1075 = vadd.f32 0.0, %v1074
        %v1076 = vpop.f32.mrf.mxu0
        %v1077 = vadd.f32 0.0, %v1076
        %1078 = vmatprep.mubr.f32.mxu0 0.0
        %1079 = vmatmul.mubr.f32.gmra.mxu0 %v973
        %v1080 = vpop.f32.mrf.mxu0
        %v1081 = vadd.f32 0.0, %v1080
        %v1082 = vpop.f32.mrf.mxu0
        %v1083 = vadd.f32 0.0, %v1082
        %1084 = vmatprep.mubr.f32.mxu0 0.0
        %1085 = vmatmul.mubr.f32.gmra.mxu0 %v976
        %v1086 = vpop.f32.mrf.mxu0
        %v1087 = vadd.f32 0.0, %v1086
        %v1088 = vpop.f32.mrf.mxu0
        %v1089 = vadd.f32 0.0, %v1088
        %1090 = vmatprep.mubr.f32.mxu0 0.0
        %1091 = vmatmul.mubr.f32.gmra.mxu0 %v979
        %v1092 = vpop.f32.mrf.mxu0
        %v1093 = vadd.f32 0.0, %v1092
        %v1094 = vpop.f32.mrf.mxu0
        %v1095 = vadd.f32 0.0, %v1094
        %1096 = vmatprep.mubr.f32.mxu0 0.0
        %1097 = vmatmul.mubr.f32.gmra.mxu0 %v982
        %v1098 = vpop.f32.mrf.mxu0
        %v1099 = vadd.f32 0.0, %v1098
        %v1100 = vpop.f32.mrf.mxu0
        %v1101 = vadd.f32 0.0, %v1100
        %1102 = vmatprep.mubr.f32.mxu0 0.0
        %1103 = vmatmul.mubr.f32.gmra.mxu0 %v985
        %v1104 = vpop.f32.mrf.mxu0
        %v1105 = vadd.f32 0.0, %v1104
        %v1106 = vpop.f32.mrf.mxu0
        %v1107 = vadd.f32 0.0, %v1106
        %1108 = vmatprep.mubr.f32.mxu0 0.0
        %1109 = vmatmul.mubr.f32.gmra.mxu0 %v988
        %v1110 = vpop.f32.mrf.mxu0
        %v1111 = vadd.f32 0.0, %v1110
        %v1112 = vpop.f32.mrf.mxu0
        %v1113 = vadd.f32 0.0, %v1112
        %1114 = vdwg.mxu0
        %1115 = vrot.lane.b32.xlu0 %v458, 17
        %v1116 = vpop.permute.xlu0 %1115
        %1117 = vrot.lane.b32.xlu0 %v460, 17
        %v1118 = vpop.permute.xlu0 %1117
        %v1119 = vsel %vm468, %v1116, %v1118
        %v1120 = vsel %vm468, %v1118, %v1116
        %v1121 = vmul.f32 %v1063, %v1120
        %v1122 = vmul.f32 %v1065, %v1119
        %v1123 = vadd.f32 %v1121, 0.0
        %v1124 = vadd.f32 %v1122, 0.0
        %1125 = vrot.lane.b32.xlu0 %v458, 16
        %v1126 = vpop.permute.xlu0 %1125
        %1127 = vrot.lane.b32.xlu0 %v460, 16
        %v1128 = vpop.permute.xlu0 %1127
        %v1129 = vsel %vm493, %v1126, %v1128
        %v1130 = vsel %vm493, %v1128, %v1126
        %v1131 = vmul.f32 %v1069, %v1130
        %v1132 = vmul.f32 %v1071, %v1129
        %v1133 = vadd.f32 %v1123, %v1131
        %v1134 = vadd.f32 %v1124, %v1132
        %1135 = vrot.lane.b32.xlu0 %v458, 15
        %v1136 = vpop.permute.xlu0 %1135
        %1137 = vrot.lane.b32.xlu0 %v460, 15
        %v1138 = vpop.permute.xlu0 %1137
        %v1139 = vsel %vm519, %v1136, %v1138
        %v1140 = vsel %vm519, %v1138, %v1136
        %v1141 = vmul.f32 %v1075, %v1140
        %v1142 = vmul.f32 %v1077, %v1139
        %v1143 = vadd.f32 %v1133, %v1141
        %v1144 = vadd.f32 %v1134, %v1142
        %1145 = vrot.lane.b32.xlu0 %v458, 1
        %v1146 = vpop.permute.xlu0 %1145
        %1147 = vrot.lane.b32.xlu0 %v460, 1
        %v1148 = vpop.permute.xlu0 %1147
        %v1149 = vsel %vm545, %v1146, %v1148
        %v1150 = vsel %vm545, %v1148, %v1146
        %v1151 = vmul.f32 %v1081, %v1150
        %v1152 = vmul.f32 %v1083, %v1149
        %v1153 = vadd.f32 %v1143, %v1151
        %v1154 = vadd.f32 %v1144, %v1152
        %v1155 = vmul.f32 %v1087, %v458
        %v1156 = vmul.f32 %v1089, %v460
        %v1157 = vadd.f32 %v1153, %v1155
        %v1158 = vadd.f32 %v1154, %v1156
        %1159 = vrot.lane.b32.xlu0 %v458, 127
        %v1160 = vpop.permute.xlu0 %1159
        %1161 = vrot.lane.b32.xlu0 %v460, 127
        %v1162 = vpop.permute.xlu0 %1161
        %v1163 = vsel %vm575, %v1160, %v1162
        %v1164 = vsel %vm575, %v1162, %v1160
        %v1165 = vmul.f32 %v1093, %v1163
        %v1166 = vmul.f32 %v1095, %v1164
        %v1167 = vadd.f32 %v1157, %v1165
        %v1168 = vadd.f32 %v1158, %v1166
        %1169 = vrot.lane.b32.xlu0 %v458, 113
        %v1170 = vpop.permute.xlu0 %1169
        %1171 = vrot.lane.b32.xlu0 %v460, 113
        %v1172 = vpop.permute.xlu0 %1171
        %v1173 = vsel %vm601, %v1170, %v1172
        %v1174 = vsel %vm601, %v1172, %v1170
        %v1175 = vmul.f32 %v1099, %v1173
        %v1176 = vmul.f32 %v1101, %v1174
        %v1177 = vadd.f32 %v1167, %v1175
        %v1178 = vadd.f32 %v1168, %v1176
        %1179 = vrot.lane.b32.xlu0 %v458, 112
        %v1180 = vpop.permute.xlu0 %1179
        %1181 = vrot.lane.b32.xlu0 %v460, 112
        %v1182 = vpop.permute.xlu0 %1181
        %v1183 = vsel %vm627, %v1180, %v1182
        %v1184 = vsel %vm627, %v1182, %v1180
        %v1185 = vmul.f32 %v1105, %v1183
        %v1186 = vmul.f32 %v1107, %v1184
        %v1187 = vadd.f32 %v1177, %v1185
        %v1188 = vadd.f32 %v1178, %v1186
        %1189 = vrot.lane.b32.xlu0 %v458, 111
        %v1190 = vpop.permute.xlu0 %1189
        %1191 = vrot.lane.b32.xlu0 %v460, 111
        %v1192 = vpop.permute.xlu0 %1191
        %v1193 = vsel %vm653, %v1190, %v1192
        %v1194 = vsel %vm653, %v1192, %v1190
        %v1195 = vmul.f32 %v1111, %v1193
        %v1196 = vmul.f32 %v1113, %v1194
        %v1197 = vadd.f32 %v1187, %v1195
        %v1198 = vadd.f32 %v1188, %v1196
        %v1199 = vld [vmem:[%s6] sm:$0xff]
        %v1200 = vld [vmem:[%s7] sm:$0xff]
        %1202 = vset.pattern.permute.xlu0 0
        %1203 = vperm.xlu0 %1202, %v1200
        %v1204 = vpop.permute.xlu0 %1203
        %v1207 = vsel %vm369, %v1199, 0
        %1209 = vmatprep.subr.mxu0 0.0
        %1210 = vmatpush1.msra.mxu0 0.0
        %1211 = vmatprep.subr.mxu0 0.0
        %1212 = vmatpush1.msra.mxu0 0.0
        %1213 = vmatprep.subr.mxu0 0.0
        %1214 = vmatpush1.msra.mxu0 0.0
        %1215 = vmatprep.subr.mxu0 0.0
        %1216 = vmatpush1.msra.mxu0 0.0
        %1217 = vmatprep.subr.mxu0 0.0
        %1218 = vmatpush1.msra.mxu0 0.0
        %1219 = vmatprep.subr.mxu0 0.0
        %1220 = vmatpush1.msra.mxu0 0.0
        %1221 = vmatprep.subr.mxu0 0.0
        %1222 = vmatpush1.msra.mxu0 0.0
        %1223 = vmatprep.subr.mxu0 0.0
        %1224 = vmatpush1.msra.mxu0 0.0
        %1225 = vmatprep.subr.mxu0 0.0
        %1226 = vmatpush1.msra.mxu0 0.0
        %1227 = vmatprep.subr.mxu0 0.0
        %1228 = vmatpush1.msra.mxu0 0.0
        %1229 = vmatprep.subr.mxu0 0.0
        %1230 = vmatpush1.msra.mxu0 0.0
        %1231 = vmatprep.subr.mxu0 0.0
        %1232 = vmatpush1.msra.mxu0 0.0
        %1233 = vmatprep.subr.mxu0 0.0
        %1234 = vmatpush1.msra.mxu0 0.0
        %1235 = vmatprep.subr.mxu0 0.0
        %1236 = vmatpush1.msra.mxu0 0.0
        %1237 = vmatprep.subr.mxu0 0.0
        %1238 = vmatpush1.msra.mxu0 0.0
        %1239 = vmatprep.subr.mxu0 %v1198
        %1240 = vmatpush1.msra.mxu0 %v1197
        %1241 = vmatprep.subr.mxu0 0.0
        %1242 = vmatpush2.msra.mxu0 0.0
        %1243 = vmatprep.subr.mxu0 0.0
        %1244 = vmatpush2.msra.mxu0 0.0
        %1245 = vmatprep.subr.mxu0 0.0
        %1246 = vmatpush2.msra.mxu0 0.0
        %1247 = vmatprep.subr.mxu0 0.0
        %1248 = vmatpush2.msra.mxu0 0.0
        %1249 = vmatprep.subr.mxu0 0.0
        %1250 = vmatpush2.msra.mxu0 0.0
        %1251 = vmatprep.subr.mxu0 0.0
        %1252 = vmatpush2.msra.mxu0 0.0
        %1253 = vmatprep.subr.mxu0 0.0
        %1254 = vmatpush2.msra.mxu0 0.0
        %1255 = vmatprep.subr.mxu0 0.0
        %1256 = vmatpush2.msra.mxu0 0.0
        %1257 = vmatprep.subr.mxu0 0.0
        %1258 = vmatpush2.msra.mxu0 0.0
        %1259 = vmatprep.subr.mxu0 0.0
        %1260 = vmatpush2.msra.mxu0 0.0
        %1261 = vmatprep.subr.mxu0 0.0
        %1262 = vmatpush2.msra.mxu0 0.0
        %1263 = vmatprep.subr.mxu0 0.0
        %1264 = vmatpush2.msra.mxu0 0.0
        %1265 = vmatprep.subr.mxu0 0.0
        %1266 = vmatpush2.msra.mxu0 0.0
        %1267 = vmatprep.subr.mxu0 0.0
        %1268 = vmatpush2.msra.mxu0 0.0
        %1269 = vmatprep.subr.mxu0 0.0
        %1270 = vmatpush2.msra.mxu0 0.0
        %1271 = vmatprep.subr.mxu0 0.0
        %1272 = vmatpush2.msra.mxu0 0.0
        %1273 = vmatprep.mubr.f32.mxu0 0.0
        %1274 = vmatmul.mubr.f32.gmra.mxu0 %v1207
        %v1275 = vpop.f32.mrf.mxu0
        %v1276 = vadd.f32 %v1204, %v1275
        %v1277 = vpop.f32.mrf.mxu0
        %v1278 = vadd.f32 %v1204, %v1277
        %1279 = vdwg.mxu0
        %1280 = vst [vmem:[%s299] sm:$0xff] %v1276
        %1281 = vst [vmem:[%s299 + $0x8] sm:$0xff] %v1278
        %s1282 = sand.u32 %s203, 1
        %s1283 = scalar_lea.sflag [#allocation4], %s1282
        %s1284 = sand.u32 %s203, 1
        %s1285 = smul.addr %s1284, 16
        %s1286 = scalar_lea.vmem [#allocation3], %s1285
        // Predicated region
        $region53: #{tpu_custom_call.1} parent=51 // pred_check
          %p1287 = pneg %p213
        $region54: #{tpu_custom_call.1} parent=51 // pred_check_branch
          %1289 = sbr.rel (%p1287) target = $region56
        $region55: #{tpu_custom_call.1} parent=51 // pred_region
          %s1290 = smul.u32 2, %s22
          %s1292 = ssub.s32 256, 256
          %1293 = vsyncadd %s1283, %s1292
          %s1294 = smul.addr %s1290, 128
          %s1295 = scalar_lea.hbm %s8, %s1294
          %s1297 = sshll.u32 %s1286, 4
          %s1298 = int_to_ptr.vmem [resolvable:$true] %s1297
          %1300 = dma.vmem_to_hbm [thread:$0]  %s1298, 256, %s1295, %s1283
        $region56: #{tpu_custom_call.1} parent=51 // pred_fallthru
          _
      $region52: #{tpu_custom_call.1} parent=5 // pred_fallthru
        _
      %p1301 = scmp.le.s32.totalorder 2, %s17
      // Predicated region
      $region57: #{tpu_custom_call.1} parent=5 // pred_check
        %p1302 = pneg %p1301
      $region58: #{tpu_custom_call.1} parent=5 // pred_check_branch
        %1304 = sbr.rel (%p1302) target = $region60
      $region59: #{tpu_custom_call.1} parent=5 // pred_region
        %s1305 = ssub.s32 %s17, 2
        // Predicated region
        $region61: #{tpu_custom_call.1} parent=59 // pred_check
          %p1306 = pneg %p219
        $region62: #{tpu_custom_call.1} parent=59 // pred_check_branch
          %1308 = sbr.rel (%p1306) target = $region64
        $region63: #{tpu_custom_call.1} parent=59 // pred_region
          %s1309 = sand.u32 %s204, 1
          %s1310 = scalar_lea.sflag [#allocation4], %s1309
          %s1311 = sand.u32 %s204, 1
          %s1312 = smul.addr %s1311, 16
          %s1313 = scalar_lea.vmem [#allocation3], %s1312
          %1314 = dma.done %s1310, 256
        $region64: #{tpu_custom_call.1} parent=59 // pred_fallthru
          _
      $region60: #{tpu_custom_call.1} parent=5 // pred_fallthru
        _
    $region6: #{tpu_custom_call.1} parent=1 // loop_footer
      %s21 = sadd.s32 1, %s17
    $region7: #{tpu_custom_call.1} parent=1 // loop_footer_branch
      %16 = sbr.rel target = $region3
    $region8: #{tpu_custom_call.1} parent=1 // loop_exit
      _
    %1315 = vsyncpa [#allocation4], 1
    %s1316 = scalar_lea.sflag [#allocation4], 1
    %1317 = vsyncpa %s1316, 1

</llo_original>
